<compile_context>
chip_gen: v7x
topology: tpu7x:2x2x1
jax: 0.10.0
libtpu: 0.0.40
codegen_flags: <defaults>
</compile_context>

<pallas_src>
import time
import numpy as np
import jax
import jax.numpy as jnp
from jax import lax
from jax.experimental import pallas as pl
from jax.experimental.pallas import tpu as pltpu

C = 299792458.0
PHI = (1.0 + np.sqrt(5.0)) / 2.0

DIM = 16          # embed dim (must be divisible by num_heads=8)
BATCH = 8         # batch size == attention sequence length
NUM_HEADS = 8
HEAD_DIM = DIM // NUM_HEADS
EPS = 1e-5

PACK_W = 8 * DIM      # 128 — full vreg lane width
VEC_ROWS = 16         # 8-aligned block holding all 1-row bias/affine vectors

# row indices inside the "vecs" block
V_B0, V_B2, V_LNG, V_LNB, V_BNG, V_BNB, V_B3, V_BO, V_UB1, V_UB2 = range(10)


# ----------------------------------------------------------------------------
# Packed-parameter layout: one contiguous [PACK_ROWS, 128] f32 slab.
# Each entry: name -> (row_offset, n_rows, n_cols); chunks are 8-row aligned.
# ----------------------------------------------------------------------------
def _build_layout(d):
    entries = [
        ("w0", d, 8 * d),            # fused stage-1: [ew1|nw1|wq|wk|wv]  [16,128]
        ("w2", 5 * d, 6 * d),        # block-diag stage-2: ew2 / nw2       [80, 96]
        ("w3", 6 * d, 2 * d),        # block-diag stage-3: ew3 / nw3       [96, 32]
        ("wo", d, d),                # attention out-proj                  [16, 16]
        ("uw1", 3 * d, 2 * d),       # unity synth L1                      [48, 32]
        ("uw2", 2 * d, d),           # unity synth L2                      [32, 16]
        ("hmask", NUM_HEADS * BATCH, d),   # stacked per-head feature mask [64, 16]
        ("vecs", VEC_ROWS, 8 * d),   # all bias / affine rows              [16,128]
    ]
    layout = {}
    row = 0
    for name, nr, nc in entries:
        layout[name] = (row, nr, nc)
        row += ((nr + 7) // 8) * 8          # keep every chunk sublane-aligned
    return layout, row


LAYOUT, PACK_ROWS = _build_layout(DIM)      # PACK_ROWS == 368


# ----------------------------------------------------------------------------
# Pallas kernel: the entire forward hot path (3 MLPs + LayerNorm + BatchNorm +
# 8-head self-attention + all scalar reductions) in one VMEM-resident call.
#   inputs : state [B, D], wpack [PACK_ROWS, 128]
#   output : out   [B, 128]  (euler | einstein | unity | scalar-row | pad)
# scalar-row lanes: 0=mean(euler[:, :D/2]) 1=mean(euler[:, D/2:])
#                   2=sum(einstein^2) 3=mean(unity) 4=mean(|unity-1|)
# ----------------------------------------------------------------------------
def unity_kernel(state_ref, wpack_ref, out_ref):
    x = state_ref[...]                      # [B, D] f32
    B = x.shape[0]
    D = DIM

    def W(name):
        r0, nr, nc = LAYOUT[name]
        return wpack_ref[r0:r0 + nr, 0:nc]  # static slice load from VMEM

    vr0 = LAYOUT["vecs"][0]

    def vec(i, n):
        return wpack_ref[vr0 + i:vr0 + i + 1, 0:n]   # [1, n] bias/affine row

    inv_sqrt2 = 0.7071067811865476

    def gelu(v):  # exact (erf) GELU, matching nn.GELU()
        return 0.5 * v * (1.0 + lax.erf(v * inv_sqrt2))

    def relu(v):
        return jnp.maximum(v, 0.0)

    # -------- fused stage 1: x @ [ew1 | nw1 | wq | wk | wv]  (one push) -----
    y0 = jnp.dot(x, W("w0"), preferred_element_type=jnp.float32) + vec(V_B0, 8 * D)
    # lanes 0:32 euler hidden | 32:80 einstein hidden | 80:96 q | 96:112 k | 112:128 v
    q = y0[:, 5 * D:6 * D]
    k = y0[:, 6 * D:7 * D]
    v = y0[:, 7 * D:8 * D]

    # -------- fused stage 2 (block-diagonal): gelu/relu then [8,80]@[80,96] --
    y0_hg = y0[:, 0:5 * D]                                # [B, 80]
    lane80 = lax.broadcasted_iota(jnp.int32, (1, 5 * D), 1)
    hg_act = jnp.where(lane80 < 2 * D, gelu(y0_hg), relu(y0_hg))
    y2 = jnp.dot(hg_act, W("w2"), preferred_element_type=jnp.float32) + vec(V_B2, 6 * D)
    h = y2[:, 0:4 * D]                                    # euler branch  [B, 64]
    g = y2[:, 4 * D:6 * D]                                # einstein branch [B, 32]

    # LayerNorm(4D) over features, then GELU
    mu = jnp.mean(h, axis=-1, keepdims=True)
    var = jnp.mean((h - mu) * (h - mu), axis=-1, keepdims=True)
    h = (h - mu) * lax.rsqrt(var + EPS) * vec(V_LNG, 4 * D) + vec(V_LNB, 4 * D)
    h = gelu(h)

    # BatchNorm1d(2D), training mode: batch statistics (biased variance), ReLU
    bmu = jnp.mean(g, axis=0, keepdims=True)
    bvar = jnp.mean((g - bmu) * (g - bmu), axis=0, keepdims=True)
    g = (g - bmu) * lax.rsqrt(bvar + EPS) * vec(V_BNG, 2 * D) + vec(V_BNB, 2 * D)
    g = relu(g)

    # -------- fused stage 3 (block-diagonal): [8,96]@[96,32] -----------------
    hg = jnp.concatenate([h, g], axis=-1)                 # [B, 96]
    y3 = jnp.dot(hg, W("w3"), preferred_element_type=jnp.float32) + vec(V_B3, 2 * D)
    softplus = jnp.maximum(y3, 0.0) + jnp.log(1.0 + jnp.exp(-jnp.abs(y3)))
    lane32 = lax.broadcasted_iota(jnp.int32, (1, 2 * D), 1)
    ei = jnp.where(lane32 < D, jnp.tanh(y3), softplus)    # euler | einstein  [B, 32]
    euler = ei[:, 0:D]
    einstein = ei[:, D:2 * D]

    # -------- multihead self-attention: all 8 heads in one shot --------------
    mask = W("hmask")                                     # [64, 16] stacked head mask
    qs = jnp.concatenate([q] * NUM_HEADS, axis=0)         # [64, 16]
    scale = 1.0 / float(np.sqrt(HEAD_DIM))
    # (q*m)·k == (q*m)·(k*m) since the mask is 0/1; contract over features.
    s = lax.dot_general(qs * mask, k, (((1,), (1,)), ((), ())),
                        preferred_element_type=jnp.float32) * scale   # [64, 8]
    s = s - jnp.max(s, axis=-1, keepdims=True)
    p = jnp.exp(s)
    p = p / jnp.sum(p, axis=-1, keepdims=True)            # exact softmax
    po = jnp.dot(p, v, preferred_element_type=jnp.float32) * mask     # [64, 16]
    attn = jnp.zeros((B, D), jnp.float32)
    for hh in range(NUM_HEADS):                           # fold disjoint heads
        attn = attn + po[hh * B:(hh + 1) * B, :]
    attended = (jnp.dot(attn, W("wo"), preferred_element_type=jnp.float32)
                + vec(V_BO, D))

    # -------- unity synthesizer: cat([euler, einstein, attended]) ------------
    u_in = jnp.concatenate([ei, attended], axis=-1)       # [B, 48]
    u = gelu(jnp.dot(u_in, W("uw1"), preferred_element_type=jnp.float32)
             + vec(V_UB1, 2 * D))
    unity = jax.nn.sigmoid(jnp.dot(u, W("uw2"), preferred_element_type=jnp.float32)
                           + vec(V_UB2, D))               # [B, D]

    # -------- reductions ------------------------------------------------------
    half = D // 2
    euler_re = jnp.mean(euler[:, :half], keepdims=True)          # (1,1)
    euler_im = jnp.mean(euler[:, half:], keepdims=True)          # (1,1)
    einstein_sq = jnp.sum(einstein * einstein, keepdims=True)    # (1,1)
    unity_mean = jnp.mean(unity, keepdims=True)                  # (1,1)
    cons_unity = jnp.mean(jnp.abs(unity - 1.0), keepdims=True)   # (1,1)

    laneD = lax.broadcasted_iota(jnp.int32, (1, D), 1)
    scal = (jnp.where(laneD == 0, euler_re, 0.0)
            + jnp.where(laneD == 1, euler_im, 0.0)
            + jnp.where(laneD == 2, einstein_sq, 0.0)
            + jnp.where(laneD == 3, unity_mean, 0.0)
            + jnp.where(laneD == 4, cons_unity, 0.0))            # (1, D)
    scal = jnp.broadcast_to(scal, (B, D))   # only row 0 is read on the host

    # -------- single lane-dense [B,128] store ---------------------------------
    pad = jnp.zeros((B, 4 * D), jnp.float32)
    out_ref[...] = jnp.concatenate([ei, unity, scal, pad], axis=-1)


# ----------------------------------------------------------------------------
# Module-level pallas_call + jitted device entry point (built exactly once).
# Whole working set (~190 KB slab + a few KB activations) is VMEM-resident.
# ----------------------------------------------------------------------------
_UNITY_CALL = pl.pallas_call(
    unity_kernel,
    out_shape=jax.ShapeDtypeStruct((BATCH, PACK_W), jnp.float32),
    in_specs=[pl.BlockSpec(memory_space=pltpu.MemorySpace.VMEM),
              pl.BlockSpec(memory_space=pltpu.MemorySpace.VMEM)],
    out_specs=pl.BlockSpec(memory_space=pltpu.MemorySpace.VMEM),
)


@jax.jit
def _unity_forward_device(state, wpack):
    return _UNITY_CALL(state, wpack)


# ----------------------------------------------------------------------------
# Parameter construction (deterministic, golden-ratio xavier like the module)
# and one-time packing into the fused weight slab.
# ----------------------------------------------------------------------------
def _xavier(key, fan_in, fan_out, gain):
    limit = gain * np.sqrt(6.0 / (fan_in + fan_out))
    return jax.random.uniform(key, (fan_in, fan_out), jnp.float32, -limit, limit)


def make_params(key, d=DIM):
    ks = iter(jax.random.split(key, 16))
    inv_phi = 1.0 / PHI

    def lin(kk, fi, fo, gain=inv_phi, bias_val=inv_phi):
        w = _xavier(kk, fi, fo, gain)                 # already [in, out]
        b = jnp.full((1, fo), bias_val, jnp.float32)
        return w, b

    p = {}
    # euler network: D->2D, 2D->4D, LN(4D), 4D->D
    p["ew1"], p["eb1"] = lin(next(ks), d, 2 * d)
    p["ew2"], p["eb2"] = lin(next(ks), 2 * d, 4 * d)
    p["lng"] = jnp.ones((1, 4 * d), jnp.float32)
    p["lnb"] = jnp.zeros((1, 4 * d), jnp.float32)
    p["ew3"], p["eb3"] = lin(next(ks), 4 * d, d)
    # einstein network: D->3D, 3D->2D, BN(2D), 2D->D
    p["nw1"], p["nb1"] = lin(next(ks), d, 3 * d)
    p["nw2"], p["nb2"] = lin(next(ks), 3 * d, 2 * d)
    p["bng"] = jnp.ones((1, 2 * d), jnp.float32)
    p["bnb"] = jnp.zeros((1, 2 * d), jnp.float32)
    p["nw3"], p["nb3"] = lin(next(ks), 2 * d, d)
    # attention: in_proj (xavier gain 1, bias 0), out_proj (nn.Linear -> 1/PHI)
    p["wq"] = _xavier(next(ks), d, d, 1.0)
    p["wk"] = _xavier(next(ks), d, d, 1.0)
    p["wv"] = _xavier(next(ks), d, d, 1.0)
    p["bq"] = jnp.zeros((1, d), jnp.float32)
    p["bk"] = jnp.zeros((1, d), jnp.float32)
    p["bv"] = jnp.zeros((1, d), jnp.float32)
    p["wo"], p["bo"] = lin(next(ks), d, d)
    # unity synthesizer: 3D->2D, 2D->D
    p["uw1"], p["ub1"] = lin(next(ks), 3 * d, 2 * d)
    p["uw2"], p["ub2"] = lin(next(ks), 2 * d, d)
    return p


def pack_params(p, d=DIM):
    pack = np.zeros((PACK_ROWS, PACK_W), np.float32)

    def put(name, arr):
        r0, nr, nc = LAYOUT[name]
        pack[r0:r0 + nr, :nc] = np.asarray(arr, np.float32).reshape(nr, nc)

    # fused first-stage weight [16,128]: ew1 | nw1 | wq | wk | wv
    w0 = np.concatenate([np.asarray(p[k], np.float32)
                         for k in ("ew1", "nw1", "wq", "wk", "wv")], axis=1)
    put("w0", w0)

    # block-diagonal stage-2 weight [80, 96]
    w2 = np.zeros((5 * d, 6 * d), np.float32)
    w2[0:2 * d, 0:4 * d] = np.asarray(p["ew2"], np.float32)
    w2[2 * d:5 * d, 4 * d:6 * d] = np.asarray(p["nw2"], np.float32)
    put("w2", w2)

    # block-diagonal stage-3 weight [96, 32]
    w3 = np.zeros((6 * d, 2 * d), np.float32)
    w3[0:4 * d, 0:d] = np.asarray(p["ew3"], np.float32)
    w3[4 * d:6 * d, d:2 * d] = np.asarray(p["nw3"], np.float32)
    put("w3", w3)

    put("wo", p["wo"])
    put("uw1", p["uw1"])
    put("uw2", p["uw2"])

    # constant stacked per-head feature mask [NUM_HEADS*BATCH, D]
    feat = np.arange(d)
    hidx = np.repeat(np.arange(NUM_HEADS), BATCH)
    put("hmask", (feat[None, :] // HEAD_DIM == hidx[:, None]).astype(np.float32))

    # bias / affine row block [16, 128]
    vecs = np.zeros((VEC_ROWS, PACK_W), np.float32)

    def vput(row, arr):
        a = np.asarray(arr, np.float32).reshape(-1)
        vecs[row, :a.shape[0]] = a

    vput(V_B0, np.concatenate([np.asarray(p[k], np.float32).reshape(-1)
                               for k in ("eb1", "nb1", "bq", "bk", "bv")]))
    vput(V_B2, np.concatenate([np.asarray(p["eb2"], np.float32).reshape(-1),
                               np.asarray(p["nb2"], np.float32).reshape(-1)]))
    vput(V_LNG, p["lng"])
    vput(V_LNB, p["lnb"])
    vput(V_BNG, p["bng"])
    vput(V_BNB, p["bnb"])
    vput(V_B3, np.concatenate([np.asarray(p["eb3"], np.float32).reshape(-1),
                               np.asarray(p["nb3"], np.float32).reshape(-1)]))
    vput(V_BO, p["bo"])
    vput(V_UB1, p["ub1"])
    vput(V_UB2, p["ub2"])
    put("vecs", vecs)

    return jnp.asarray(pack)


# ----------------------------------------------------------------------------
# Wrapper: one device dispatch + one device->host transfer per call.
# (For repeated stepping, keep `device_output` on device and only pull the
#  scalar row to host when actually needed.)
# ----------------------------------------------------------------------------
def einstein_euler_unity_forward(state, wpack):
    packed = _unity_forward_device(state, wpack)
    jax.block_until_ready(packed)
    host = np.asarray(jax.device_get(packed))          # single host sync

    d = DIM
    euler_f = host[:, 0:d]
    einstein_f = host[:, d:2 * d]
    unity_field = host[:, 2 * d:3 * d]
    (euler_re, euler_im, einstein_sq,
     unity_mean, cons_unity) = host[0, 3 * d:3 * d + 5]

    euler_component = complex(float(euler_re), float(euler_im))
    einstein_component = float(einstein_sq) * (C ** 2)
    unity_coherence = float(unity_mean)
    consciousness_unity = float(cons_unity)

    # UnityFieldState.__post_init__ equivalent (plain host-side glue)
    euler_unity = abs(euler_component + 1)
    einstein_unity = einstein_component / (C ** 2)
    total_unity = 1.0 / (1.0 + euler_unity + einstein_unity + consciousness_unity)

    return {
        "euler_component": euler_component,
        "einstein_component": einstein_component,
        "consciousness_field": unity_field,
        "unity_coherence": unity_coherence,
        "timestamp": time.time(),
        "total_unity": total_unity,
        # intermediate features (for inspection/testing)
        "euler_features": euler_f,
        "einstein_features": einstein_f,
        # packed device output (kept for blocking / further device work)
        "device_output": packed,
    }


if __name__ == "__main__":
    key = jax.random.PRNGKey(0)
    k_state, k_params = jax.random.split(key)

    state = jax.random.normal(k_state, (BATCH, DIM), jnp.float32)
    params = make_params(k_params, DIM)
    wpack = pack_params(params, DIM)

    result = einstein_euler_unity_forward(state, wpack)
    jax.block_until_ready(result["device_output"])

    cf = np.asarray(result["consciousness_field"])
    assert cf.shape == (BATCH, DIM)
    assert np.all(np.isfinite(cf))
    assert np.isfinite(result["unity_coherence"])
    assert np.isfinite(result["total_unity"])

    print("KERNEL_OK")
</pallas_src>

<mosaic_0001>
module attributes {stable_mosaic.version = 11 : i64} {
  func.func @unity_kernel(%arg0: memref<8x16xf32, #tpu.memory_space<vmem>>, %arg1: memref<368x128xf32, #tpu.memory_space<vmem>>, %arg2: memref<8x128xf32, #tpu.memory_space<vmem>>) attributes {dimension_semantics = [], scalar_prefetch = 0 : i64, scratch_operands = 0 : i64, tpu.core_type = #tpu.core_type<tc>} {
    %c0 = arith.constant 0 : index
    %c0_0 = arith.constant 0 : index
    %0 = vector.load %arg0[%c0, %c0_0] : memref<8x16xf32, #tpu.memory_space<vmem>>, vector<8x16xf32>
    %c0_1 = arith.constant 0 : index
    %c0_2 = arith.constant 0 : index
    %1 = vector.load %arg1[%c0_1, %c0_2] : memref<368x128xf32, #tpu.memory_space<vmem>>, vector<16x128xf32>
    %cst = arith.constant dense<0.000000e+00> : vector<8x128xf32>
    %2 = tpu.matmul %0, %1, %cst {dimension_numbers = #tpu.dot_dimension_numbers<[1], [0], [0], [1], [0, 0, 1, 1], [], []>} : vector<8x16xf32>, vector<16x128xf32>, vector<8x128xf32> -> vector<8x128xf32>
    %c352 = arith.constant 352 : index
    %c0_3 = arith.constant 0 : index
    %3 = vector.load %arg1[%c352, %c0_3] : memref<368x128xf32, #tpu.memory_space<vmem>>, vector<1x128xf32>
    %4 = vector.broadcast %3 : vector<1x128xf32> to vector<8x128xf32>
    %5 = arith.addf %2, %4 : vector<8x128xf32>
    %6 = vector.extract_strided_slice %5 {offsets = [0, 80], sizes = [8, 16], strides = [1, 1]} : vector<8x128xf32> to vector<8x16xf32>
    %7 = vector.extract_strided_slice %5 {offsets = [0, 96], sizes = [8, 16], strides = [1, 1]} : vector<8x128xf32> to vector<8x16xf32>
    %8 = vector.extract_strided_slice %5 {offsets = [0, 112], sizes = [8, 16], strides = [1, 1]} : vector<8x128xf32> to vector<8x16xf32>
    %9 = vector.extract_strided_slice %5 {offsets = [0, 0], sizes = [8, 80], strides = [1, 1]} : vector<8x128xf32> to vector<8x80xf32>
    %10 = tpu.iota {dimensions = array<i32: 1>} : vector<1x80xi32>
    %c32_i32 = arith.constant 32 : i32
    %11 = vector.broadcast %c32_i32 : i32 to vector<1x80xi32>
    %12 = arith.cmpi slt, %10, %11 : vector<1x80xi32>
    %cst_4 = arith.constant 5.000000e-01 : f32
    %13 = vector.broadcast %cst_4 : f32 to vector<8x80xf32>
    %14 = arith.mulf %13, %9 : vector<8x80xf32>
    %cst_5 = arith.constant 0.707106769 : f32
    %15 = vector.broadcast %cst_5 : f32 to vector<8x80xf32>
    %16 = arith.mulf %9, %15 : vector<8x80xf32>
    %17 = math.erf %16 : vector<8x80xf32>
    %cst_6 = arith.constant 1.000000e+00 : f32
    %18 = vector.broadcast %cst_6 : f32 to vector<8x80xf32>
    %19 = arith.addf %18, %17 : vector<8x80xf32>
    %20 = arith.mulf %14, %19 : vector<8x80xf32>
    %cst_7 = arith.constant 0.000000e+00 : f32
    %21 = vector.broadcast %cst_7 : f32 to vector<8x80xf32>
    %22 = arith.maximumf %9, %21 : vector<8x80xf32>
    %23 = vector.shape_cast %12 : vector<1x80xi1> to vector<1x80xi1>
    %24 = vector.broadcast %23 : vector<1x80xi1> to vector<8x80xi1>
    %25 = arith.select %24, %20, %22 : vector<8x80xi1>, vector<8x80xf32>
    %c16 = arith.constant 16 : index
    %c0_8 = arith.constant 0 : index
    %26 = vector.load %arg1[%c16, %c0_8] : memref<368x128xf32, #tpu.memory_space<vmem>>, vector<80x96xf32>
    %cst_9 = arith.constant dense<0.000000e+00> : vector<8x96xf32>
    %27 = tpu.matmul %25, %26, %cst_9 {dimension_numbers = #tpu.dot_dimension_numbers<[1], [0], [0], [1], [0, 0, 1, 1], [], []>} : vector<8x80xf32>, vector<80x96xf32>, vector<8x96xf32> -> vector<8x96xf32>
    %c353 = arith.constant 353 : index
    %c0_10 = arith.constant 0 : index
    %28 = vector.load %arg1[%c353, %c0_10] : memref<368x128xf32, #tpu.memory_space<vmem>>, vector<1x96xf32>
    %29 = vector.broadcast %28 : vector<1x96xf32> to vector<8x96xf32>
    %30 = arith.addf %27, %29 : vector<8x96xf32>
    %31 = vector.extract_strided_slice %30 {offsets = [0, 0], sizes = [8, 64], strides = [1, 1]} : vector<8x96xf32> to vector<8x64xf32>
    %32 = vector.extract_strided_slice %30 {offsets = [0, 64], sizes = [8, 32], strides = [1, 1]} : vector<8x96xf32> to vector<8x32xf32>
    %cst_11 = arith.constant dense<0.000000e+00> : vector<8xf32>
    %33 = vector.multi_reduction <add>, %31, %cst_11 [1] : vector<8x64xf32> to vector<8xf32>
    %34 = vector.shape_cast %33 : vector<8xf32> to vector<8x1xf32>
    %cst_12 = arith.constant 6.400000e+01 : f32
    %35 = vector.broadcast %cst_12 : f32 to vector<8x1xf32>
    %36 = arith.divf %34, %35 : vector<8x1xf32>
    %37 = vector.broadcast %36 : vector<8x1xf32> to vector<8x64xf32>
    %38 = arith.subf %31, %37 : vector<8x64xf32>
    %39 = vector.broadcast %36 : vector<8x1xf32> to vector<8x64xf32>
    %40 = arith.subf %31, %39 : vector<8x64xf32>
    %41 = arith.mulf %38, %40 : vector<8x64xf32>
    %cst_13 = arith.constant dense<0.000000e+00> : vector<8xf32>
    %42 = vector.multi_reduction <add>, %41, %cst_13 [1] : vector<8x64xf32> to vector<8xf32>
    %43 = vector.shape_cast %42 : vector<8xf32> to vector<8x1xf32>
    %cst_14 = arith.constant 6.400000e+01 : f32
    %44 = vector.broadcast %cst_14 : f32 to vector<8x1xf32>
    %45 = arith.divf %43, %44 : vector<8x1xf32>
    %46 = vector.broadcast %36 : vector<8x1xf32> to vector<8x64xf32>
    %47 = arith.subf %31, %46 : vector<8x64xf32>
    %cst_15 = arith.constant 9.99999974E-6 : f32
    %48 = vector.broadcast %cst_15 : f32 to vector<8x1xf32>
    %49 = arith.addf %45, %48 : vector<8x1xf32>
    %50 = math.rsqrt %49 : vector<8x1xf32>
    %51 = vector.broadcast %50 : vector<8x1xf32> to vector<8x64xf32>
    %52 = arith.mulf %47, %51 : vector<8x64xf32>
    %c354 = arith.constant 354 : index
    %c0_16 = arith.constant 0 : index
    %53 = vector.load %arg1[%c354, %c0_16] : memref<368x128xf32, #tpu.memory_space<vmem>>, vector<1x64xf32>
    %54 = vector.broadcast %53 : vector<1x64xf32> to vector<8x64xf32>
    %55 = arith.mulf %52, %54 : vector<8x64xf32>
    %c355 = arith.constant 355 : index
    %c0_17 = arith.constant 0 : index
    %56 = vector.load %arg1[%c355, %c0_17] : memref<368x128xf32, #tpu.memory_space<vmem>>, vector<1x64xf32>
    %57 = vector.broadcast %56 : vector<1x64xf32> to vector<8x64xf32>
    %58 = arith.addf %55, %57 : vector<8x64xf32>
    %cst_18 = arith.constant 5.000000e-01 : f32
    %59 = vector.broadcast %cst_18 : f32 to vector<8x64xf32>
    %60 = arith.mulf %59, %58 : vector<8x64xf32>
    %cst_19 = arith.constant 0.707106769 : f32
    %61 = vector.broadcast %cst_19 : f32 to vector<8x64xf32>
    %62 = arith.mulf %58, %61 : vector<8x64xf32>
    %63 = math.erf %62 : vector<8x64xf32>
    %cst_20 = arith.constant 1.000000e+00 : f32
    %64 = vector.broadcast %cst_20 : f32 to vector<8x64xf32>
    %65 = arith.addf %64, %63 : vector<8x64xf32>
    %66 = arith.mulf %60, %65 : vector<8x64xf32>
    %cst_21 = arith.constant dense<0.000000e+00> : vector<32xf32>
    %67 = vector.multi_reduction <add>, %32, %cst_21 [0] : vector<8x32xf32> to vector<32xf32>
    %68 = vector.shape_cast %67 : vector<32xf32> to vector<1x32xf32>
    %cst_22 = arith.constant 8.000000e+00 : f32
    %69 = vector.broadcast %cst_22 : f32 to vector<1x32xf32>
    %70 = arith.divf %68, %69 : vector<1x32xf32>
    %71 = vector.broadcast %70 : vector<1x32xf32> to vector<8x32xf32>
    %72 = arith.subf %32, %71 : vector<8x32xf32>
    %73 = vector.broadcast %70 : vector<1x32xf32> to vector<8x32xf32>
    %74 = arith.subf %32, %73 : vector<8x32xf32>
    %75 = arith.mulf %72, %74 : vector<8x32xf32>
    %cst_23 = arith.constant dense<0.000000e+00> : vector<32xf32>
    %76 = vector.multi_reduction <add>, %75, %cst_23 [0] : vector<8x32xf32> to vector<32xf32>
    %77 = vector.shape_cast %76 : vector<32xf32> to vector<1x32xf32>
    %cst_24 = arith.constant 8.000000e+00 : f32
    %78 = vector.broadcast %cst_24 : f32 to vector<1x32xf32>
    %79 = arith.divf %77, %78 : vector<1x32xf32>
    %80 = vector.broadcast %70 : vector<1x32xf32> to vector<8x32xf32>
    %81 = arith.subf %32, %80 : vector<8x32xf32>
    %cst_25 = arith.constant 9.99999974E-6 : f32
    %82 = vector.broadcast %cst_25 : f32 to vector<1x32xf32>
    %83 = arith.addf %79, %82 : vector<1x32xf32>
    %84 = math.rsqrt %83 : vector<1x32xf32>
    %85 = vector.broadcast %84 : vector<1x32xf32> to vector<8x32xf32>
    %86 = arith.mulf %81, %85 : vector<8x32xf32>
    %c356 = arith.constant 356 : index
    %c0_26 = arith.constant 0 : index
    %87 = vector.load %arg1[%c356, %c0_26] : memref<368x128xf32, #tpu.memory_space<vmem>>, vector<1x32xf32>
    %88 = vector.broadcast %87 : vector<1x32xf32> to vector<8x32xf32>
    %89 = arith.mulf %86, %88 : vector<8x32xf32>
    %c357 = arith.constant 357 : index
    %c0_27 = arith.constant 0 : index
    %90 = vector.load %arg1[%c357, %c0_27] : memref<368x128xf32, #tpu.memory_space<vmem>>, vector<1x32xf32>
    %91 = vector.broadcast %90 : vector<1x32xf32> to vector<8x32xf32>
    %92 = arith.addf %89, %91 : vector<8x32xf32>
    %cst_28 = arith.constant 0.000000e+00 : f32
    %93 = vector.broadcast %cst_28 : f32 to vector<8x32xf32>
    %94 = arith.maximumf %92, %93 : vector<8x32xf32>
    %95 = tpu.concatenate %66, %94 in 1 : vector<8x64xf32>, vector<8x32xf32> -> vector<8x96xf32>
    %c96 = arith.constant 96 : index
    %c0_29 = arith.constant 0 : index
    %96 = vector.load %arg1[%c96, %c0_29] : memref<368x128xf32, #tpu.memory_space<vmem>>, vector<96x32xf32>
    %cst_30 = arith.constant dense<0.000000e+00> : vector<8x32xf32>
    %97 = tpu.matmul %95, %96, %cst_30 {dimension_numbers = #tpu.dot_dimension_numbers<[1], [0], [0], [1], [0, 0, 1, 1], [], []>} : vector<8x96xf32>, vector<96x32xf32>, vector<8x32xf32> -> vector<8x32xf32>
    %c358 = arith.constant 358 : index
    %c0_31 = arith.constant 0 : index
    %98 = vector.load %arg1[%c358, %c0_31] : memref<368x128xf32, #tpu.memory_space<vmem>>, vector<1x32xf32>
    %99 = vector.broadcast %98 : vector<1x32xf32> to vector<8x32xf32>
    %100 = arith.addf %97, %99 : vector<8x32xf32>
    %cst_32 = arith.constant 0.000000e+00 : f32
    %101 = vector.broadcast %cst_32 : f32 to vector<8x32xf32>
    %102 = arith.maximumf %100, %101 : vector<8x32xf32>
    %103 = math.absf %100 : vector<8x32xf32>
    %cst_33 = arith.constant 0.000000e+00 : f32
    %104 = vector.broadcast %cst_33 : f32 to vector<8x32xf32>
    %105 = arith.subf %104, %103 : vector<8x32xf32>
    %106 = math.exp %105 : vector<8x32xf32>
    %cst_34 = arith.constant 1.000000e+00 : f32
    %107 = vector.broadcast %cst_34 : f32 to vector<8x32xf32>
    %108 = arith.addf %107, %106 : vector<8x32xf32>
    %109 = math.log %108 : vector<8x32xf32>
    %110 = arith.addf %102, %109 : vector<8x32xf32>
    %111 = tpu.iota {dimensions = array<i32: 1>} : vector<1x32xi32>
    %c16_i32 = arith.constant 16 : i32
    %112 = vector.broadcast %c16_i32 : i32 to vector<1x32xi32>
    %113 = arith.cmpi slt, %111, %112 : vector<1x32xi32>
    %114 = math.tanh %100 : vector<8x32xf32>
    %115 = vector.shape_cast %113 : vector<1x32xi1> to vector<1x32xi1>
    %116 = vector.broadcast %115 : vector<1x32xi1> to vector<8x32xi1>
    %117 = arith.select %116, %114, %110 : vector<8x32xi1>, vector<8x32xf32>
    %118 = vector.extract_strided_slice %117 {offsets = [0, 0], sizes = [8, 16], strides = [1, 1]} : vector<8x32xf32> to vector<8x16xf32>
    %119 = vector.extract_strided_slice %117 {offsets = [0, 16], sizes = [8, 16], strides = [1, 1]} : vector<8x32xf32> to vector<8x16xf32>
    %c288 = arith.constant 288 : index
    %c0_35 = arith.constant 0 : index
    %120 = vector.load %arg1[%c288, %c0_35] : memref<368x128xf32, #tpu.memory_space<vmem>>, vector<64x16xf32>
    %121 = tpu.concatenate %6, %6, %6, %6, %6, %6, %6, %6 in 0 : vector<8x16xf32>, vector<8x16xf32>, vector<8x16xf32>, vector<8x16xf32>, vector<8x16xf32>, vector<8x16xf32>, vector<8x16xf32>, vector<8x16xf32> -> vector<64x16xf32>
    %122 = arith.mulf %121, %120 : vector<64x16xf32>
    %cst_36 = arith.constant dense<0.000000e+00> : vector<64x8xf32>
    %123 = tpu.matmul %122, %7, %cst_36 {dimension_numbers = #tpu.dot_dimension_numbers<[1], [1], [0], [0], [0, 0, 1, 0], [], []>} : vector<64x16xf32>, vector<8x16xf32>, vector<64x8xf32> -> vector<64x8xf32>
    %cst_37 = arith.constant 0.707106769 : f32
    %124 = vector.broadcast %cst_37 : f32 to vector<64x8xf32>
    %125 = arith.mulf %123, %124 : vector<64x8xf32>
    %cst_38 = arith.constant dense<0xFF800000> : vector<64xf32>
    %126 = vector.multi_reduction <maximumf>, %125, %cst_38 [1] : vector<64x8xf32> to vector<64xf32>
    %127 = vector.shape_cast %126 : vector<64xf32> to vector<64x1xf32>
    %128 = vector.broadcast %127 : vector<64x1xf32> to vector<64x8xf32>
    %129 = arith.subf %125, %128 : vector<64x8xf32>
    %130 = math.exp %129 : vector<64x8xf32>
    %cst_39 = arith.constant dense<0.000000e+00> : vector<64xf32>
    %131 = vector.multi_reduction <add>, %130, %cst_39 [1] : vector<64x8xf32> to vector<64xf32>
    %132 = vector.shape_cast %131 : vector<64xf32> to vector<64x1xf32>
    %133 = vector.broadcast %132 : vector<64x1xf32> to vector<64x8xf32>
    %134 = arith.divf %130, %133 : vector<64x8xf32>
    %cst_40 = arith.constant dense<0.000000e+00> : vector<64x16xf32>
    %135 = tpu.matmul %134, %8, %cst_40 {dimension_numbers = #tpu.dot_dimension_numbers<[1], [0], [0], [1], [0, 0, 1, 1], [], []>} : vector<64x8xf32>, vector<8x16xf32>, vector<64x16xf32> -> vector<64x16xf32>
    %136 = arith.mulf %135, %120 : vector<64x16xf32>
    %cst_41 = arith.constant 0.000000e+00 : f32
    %137 = vector.broadcast %cst_41 : f32 to vector<8x16xf32>
    %138 = vector.extract_strided_slice %136 {offsets = [0, 0], sizes = [8, 16], strides = [1, 1]} : vector<64x16xf32> to vector<8x16xf32>
    %139 = arith.addf %137, %138 : vector<8x16xf32>
    %140 = vector.extract_strided_slice %136 {offsets = [8, 0], sizes = [8, 16], strides = [1, 1]} : vector<64x16xf32> to vector<8x16xf32>
    %141 = arith.addf %139, %140 : vector<8x16xf32>
    %142 = vector.extract_strided_slice %136 {offsets = [16, 0], sizes = [8, 16], strides = [1, 1]} : vector<64x16xf32> to vector<8x16xf32>
    %143 = arith.addf %141, %142 : vector<8x16xf32>
    %144 = vector.extract_strided_slice %136 {offsets = [24, 0], sizes = [8, 16], strides = [1, 1]} : vector<64x16xf32> to vector<8x16xf32>
    %145 = arith.addf %143, %144 : vector<8x16xf32>
    %146 = vector.extract_strided_slice %136 {offsets = [32, 0], sizes = [8, 16], strides = [1, 1]} : vector<64x16xf32> to vector<8x16xf32>
    %147 = arith.addf %145, %146 : vector<8x16xf32>
    %148 = vector.extract_strided_slice %136 {offsets = [40, 0], sizes = [8, 16], strides = [1, 1]} : vector<64x16xf32> to vector<8x16xf32>
    %149 = arith.addf %147, %148 : vector<8x16xf32>
    %150 = vector.extract_strided_slice %136 {offsets = [48, 0], sizes = [8, 16], strides = [1, 1]} : vector<64x16xf32> to vector<8x16xf32>
    %151 = arith.addf %149, %150 : vector<8x16xf32>
    %152 = vector.extract_strided_slice %136 {offsets = [56, 0], sizes = [8, 16], strides = [1, 1]} : vector<64x16xf32> to vector<8x16xf32>
    %153 = arith.addf %151, %152 : vector<8x16xf32>
    %c192 = arith.constant 192 : index
    %c0_42 = arith.constant 0 : index
    %154 = vector.load %arg1[%c192, %c0_42] : memref<368x128xf32, #tpu.memory_space<vmem>>, vector<16x16xf32>
    %cst_43 = arith.constant dense<0.000000e+00> : vector<8x16xf32>
    %155 = tpu.matmul %153, %154, %cst_43 {dimension_numbers = #tpu.dot_dimension_numbers<[1], [0], [0], [1], [0, 0, 1, 1], [], []>} : vector<8x16xf32>, vector<16x16xf32>, vector<8x16xf32> -> vector<8x16xf32>
    %c359 = arith.constant 359 : index
    %c0_44 = arith.constant 0 : index
    %156 = vector.load %arg1[%c359, %c0_44] : memref<368x128xf32, #tpu.memory_space<vmem>>, vector<1x16xf32>
    %157 = vector.broadcast %156 : vector<1x16xf32> to vector<8x16xf32>
    %158 = arith.addf %155, %157 : vector<8x16xf32>
    %159 = tpu.concatenate %117, %158 in 1 : vector<8x32xf32>, vector<8x16xf32> -> vector<8x48xf32>
    %c208 = arith.constant 208 : index
    %c0_45 = arith.constant 0 : index
    %160 = vector.load %arg1[%c208, %c0_45] : memref<368x128xf32, #tpu.memory_space<vmem>>, vector<48x32xf32>
    %cst_46 = arith.constant dense<0.000000e+00> : vector<8x32xf32>
    %161 = tpu.matmul %159, %160, %cst_46 {dimension_numbers = #tpu.dot_dimension_numbers<[1], [0], [0], [1], [0, 0, 1, 1], [], []>} : vector<8x48xf32>, vector<48x32xf32>, vector<8x32xf32> -> vector<8x32xf32>
    %c360 = arith.constant 360 : index
    %c0_47 = arith.constant 0 : index
    %162 = vector.load %arg1[%c360, %c0_47] : memref<368x128xf32, #tpu.memory_space<vmem>>, vector<1x32xf32>
    %163 = vector.broadcast %162 : vector<1x32xf32> to vector<8x32xf32>
    %164 = arith.addf %161, %163 : vector<8x32xf32>
    %cst_48 = arith.constant 5.000000e-01 : f32
    %165 = vector.broadcast %cst_48 : f32 to vector<8x32xf32>
    %166 = arith.mulf %165, %164 : vector<8x32xf32>
    %cst_49 = arith.constant 0.707106769 : f32
    %167 = vector.broadcast %cst_49 : f32 to vector<8x32xf32>
    %168 = arith.mulf %164, %167 : vector<8x32xf32>
    %169 = math.erf %168 : vector<8x32xf32>
    %cst_50 = arith.constant 1.000000e+00 : f32
    %170 = vector.broadcast %cst_50 : f32 to vector<8x32xf32>
    %171 = arith.addf %170, %169 : vector<8x32xf32>
    %172 = arith.mulf %166, %171 : vector<8x32xf32>
    %c256 = arith.constant 256 : index
    %c0_51 = arith.constant 0 : index
    %173 = vector.load %arg1[%c256, %c0_51] : memref<368x128xf32, #tpu.memory_space<vmem>>, vector<32x16xf32>
    %cst_52 = arith.constant dense<0.000000e+00> : vector<8x16xf32>
    %174 = tpu.matmul %172, %173, %cst_52 {dimension_numbers = #tpu.dot_dimension_numbers<[1], [0], [0], [1], [0, 0, 1, 1], [], []>} : vector<8x32xf32>, vector<32x16xf32>, vector<8x16xf32> -> vector<8x16xf32>
    %c361 = arith.constant 361 : index
    %c0_53 = arith.constant 0 : index
    %175 = vector.load %arg1[%c361, %c0_53] : memref<368x128xf32, #tpu.memory_space<vmem>>, vector<1x16xf32>
    %176 = vector.broadcast %175 : vector<1x16xf32> to vector<8x16xf32>
    %177 = arith.addf %174, %176 : vector<8x16xf32>
    %178 = arith.negf %177 : vector<8x16xf32>
    %179 = math.exp %178 : vector<8x16xf32>
    %cst_54 = arith.constant 1.000000e+00 : f32
    %180 = vector.broadcast %cst_54 : f32 to vector<8x16xf32>
    %181 = arith.addf %180, %179 : vector<8x16xf32>
    %182 = arith.divf %180, %181 : vector<8x16xf32>
    %183 = vector.extract_strided_slice %118 {offsets = [0, 0], sizes = [8, 8], strides = [1, 1]} : vector<8x16xf32> to vector<8x8xf32>
    %184 = vector.shape_cast %183 : vector<8x8xf32> to vector<1x8x8xf32>
    %cst_55 = arith.constant dense<0.000000e+00> : vector<1xf32>
    %185 = vector.multi_reduction <add>, %184, %cst_55 [1, 2] : vector<1x8x8xf32> to vector<1xf32>
    %186 = vector.shape_cast %185 : vector<1xf32> to vector<1x1x1xf32>
    %187 = vector.extract %186[0, 0, 0] : f32 from vector<1x1x1xf32>
    %188 = vector.broadcast %187 : f32 to vector<1x1xf32>
    %cst_56 = arith.constant 6.400000e+01 : f32
    %189 = vector.broadcast %cst_56 : f32 to vector<1x1xf32>
    %190 = arith.divf %188, %189 : vector<1x1xf32>
    %191 = vector.extract_strided_slice %118 {offsets = [0, 8], sizes = [8, 8], strides = [1, 1]} : vector<8x16xf32> to vector<8x8xf32>
    %192 = vector.shape_cast %191 : vector<8x8xf32> to vector<1x8x8xf32>
    %cst_57 = arith.constant dense<0.000000e+00> : vector<1xf32>
    %193 = vector.multi_reduction <add>, %192, %cst_57 [1, 2] : vector<1x8x8xf32> to vector<1xf32>
    %194 = vector.shape_cast %193 : vector<1xf32> to vector<1x1x1xf32>
    %195 = vector.extract %194[0, 0, 0] : f32 from vector<1x1x1xf32>
    %196 = vector.broadcast %195 : f32 to vector<1x1xf32>
    %cst_58 = arith.constant 6.400000e+01 : f32
    %197 = vector.broadcast %cst_58 : f32 to vector<1x1xf32>
    %198 = arith.divf %196, %197 : vector<1x1xf32>
    %199 = arith.mulf %119, %119 : vector<8x16xf32>
    %200 = vector.shape_cast %199 : vector<8x16xf32> to vector<1x8x16xf32>
    %cst_59 = arith.constant dense<0.000000e+00> : vector<1xf32>
    %201 = vector.multi_reduction <add>, %200, %cst_59 [1, 2] : vector<1x8x16xf32> to vector<1xf32>
    %202 = vector.shape_cast %201 : vector<1xf32> to vector<1x1x1xf32>
    %203 = vector.extract %202[0, 0, 0] : f32 from vector<1x1x1xf32>
    %204 = vector.broadcast %203 : f32 to vector<1x1xf32>
    %205 = vector.shape_cast %182 : vector<8x16xf32> to vector<1x8x16xf32>
    %cst_60 = arith.constant dense<0.000000e+00> : vector<1xf32>
    %206 = vector.multi_reduction <add>, %205, %cst_60 [1, 2] : vector<1x8x16xf32> to vector<1xf32>
    %207 = vector.shape_cast %206 : vector<1xf32> to vector<1x1x1xf32>
    %208 = vector.extract %207[0, 0, 0] : f32 from vector<1x1x1xf32>
    %209 = vector.broadcast %208 : f32 to vector<1x1xf32>
    %cst_61 = arith.constant 1.280000e+02 : f32
    %210 = vector.broadcast %cst_61 : f32 to vector<1x1xf32>
    %211 = arith.divf %209, %210 : vector<1x1xf32>
    %cst_62 = arith.constant 1.000000e+00 : f32
    %212 = vector.broadcast %cst_62 : f32 to vector<8x16xf32>
    %213 = arith.subf %182, %212 : vector<8x16xf32>
    %214 = math.absf %213 : vector<8x16xf32>
    %215 = vector.shape_cast %214 : vector<8x16xf32> to vector<1x8x16xf32>
    %cst_63 = arith.constant dense<0.000000e+00> : vector<1xf32>
    %216 = vector.multi_reduction <add>, %215, %cst_63 [1, 2] : vector<1x8x16xf32> to vector<1xf32>
    %217 = vector.shape_cast %216 : vector<1xf32> to vector<1x1x1xf32>
    %218 = vector.extract %217[0, 0, 0] : f32 from vector<1x1x1xf32>
    %219 = vector.broadcast %218 : f32 to vector<1x1xf32>
    %cst_64 = arith.constant 1.280000e+02 : f32
    %220 = vector.broadcast %cst_64 : f32 to vector<1x1xf32>
    %221 = arith.divf %219, %220 : vector<1x1xf32>
    %222 = tpu.iota {dimensions = array<i32: 1>} : vector<1x16xi32>
    %c0_i32 = arith.constant 0 : i32
    %223 = vector.broadcast %c0_i32 : i32 to vector<1x16xi32>
    %224 = arith.cmpi eq, %222, %223 : vector<1x16xi32>
    %cst_65 = arith.constant 0.000000e+00 : f32
    %225 = vector.shape_cast %190 : vector<1x1xf32> to vector<1x1xf32>
    %226 = vector.broadcast %225 : vector<1x1xf32> to vector<1x16xf32>
    %227 = vector.broadcast %cst_65 : f32 to vector<1x16xf32>
    %228 = arith.select %224, %226, %227 : vector<1x16xi1>, vector<1x16xf32>
    %c1_i32 = arith.constant 1 : i32
    %229 = vector.broadcast %c1_i32 : i32 to vector<1x16xi32>
    %230 = arith.cmpi eq, %222, %229 : vector<1x16xi32>
    %cst_66 = arith.constant 0.000000e+00 : f32
    %231 = vector.shape_cast %198 : vector<1x1xf32> to vector<1x1xf32>
    %232 = vector.broadcast %231 : vector<1x1xf32> to vector<1x16xf32>
    %233 = vector.broadcast %cst_66 : f32 to vector<1x16xf32>
    %234 = arith.select %230, %232, %233 : vector<1x16xi1>, vector<1x16xf32>
    %235 = arith.addf %228, %234 : vector<1x16xf32>
    %c2_i32 = arith.constant 2 : i32
    %236 = vector.broadcast %c2_i32 : i32 to vector<1x16xi32>
    %237 = arith.cmpi eq, %222, %236 : vector<1x16xi32>
    %cst_67 = arith.constant 0.000000e+00 : f32
    %238 = vector.shape_cast %204 : vector<1x1xf32> to vector<1x1xf32>
    %239 = vector.broadcast %238 : vector<1x1xf32> to vector<1x16xf32>
    %240 = vector.broadcast %cst_67 : f32 to vector<1x16xf32>
    %241 = arith.select %237, %239, %240 : vector<1x16xi1>, vector<1x16xf32>
    %242 = arith.addf %235, %241 : vector<1x16xf32>
    %c3_i32 = arith.constant 3 : i32
    %243 = vector.broadcast %c3_i32 : i32 to vector<1x16xi32>
    %244 = arith.cmpi eq, %222, %243 : vector<1x16xi32>
    %cst_68 = arith.constant 0.000000e+00 : f32
    %245 = vector.shape_cast %211 : vector<1x1xf32> to vector<1x1xf32>
    %246 = vector.broadcast %245 : vector<1x1xf32> to vector<1x16xf32>
    %247 = vector.broadcast %cst_68 : f32 to vector<1x16xf32>
    %248 = arith.select %244, %246, %247 : vector<1x16xi1>, vector<1x16xf32>
    %249 = arith.addf %242, %248 : vector<1x16xf32>
    %c4_i32 = arith.constant 4 : i32
    %250 = vector.broadcast %c4_i32 : i32 to vector<1x16xi32>
    %251 = arith.cmpi eq, %222, %250 : vector<1x16xi32>
    %cst_69 = arith.constant 0.000000e+00 : f32
    %252 = vector.shape_cast %221 : vector<1x1xf32> to vector<1x1xf32>
    %253 = vector.broadcast %252 : vector<1x1xf32> to vector<1x16xf32>
    %254 = vector.broadcast %cst_69 : f32 to vector<1x16xf32>
    %255 = arith.select %251, %253, %254 : vector<1x16xi1>, vector<1x16xf32>
    %256 = arith.addf %249, %255 : vector<1x16xf32>
    %257 = vector.shape_cast %256 : vector<1x16xf32> to vector<1x16xf32>
    %258 = vector.broadcast %257 : vector<1x16xf32> to vector<8x16xf32>
    %cst_70 = arith.constant 0.000000e+00 : f32
    %259 = vector.broadcast %cst_70 : f32 to vector<8x64xf32>
    %260 = tpu.concatenate %117, %182, %258, %259 in 1 : vector<8x32xf32>, vector<8x16xf32>, vector<8x16xf32>, vector<8x64xf32> -> vector<8x128xf32>
    %c0_71 = arith.constant 0 : index
    %c0_72 = arith.constant 0 : index
    %261 = vector.load %arg2[%c0_71, %c0_72] : memref<8x128xf32, #tpu.memory_space<vmem>>, vector<8x128xf32>
    tpu.vector_store %arg2[%c0_71, %c0_72], %260 {strides = array<i32>} : memref<8x128xf32, #tpu.memory_space<vmem>>, vector<8x128xf32>,
    return
  }
}

</mosaic_0001>

<llo_original>
// kernel: _unity_forward_device.1
$region0: #{_unity_forward_device.1}
  #allocation0 [shape = 'u32[]', space=smem, size = 0x4, offset = 0x4, fixed_abs, tag = 'smem constant byte address 0x4 - core index']
  #allocation1 [shape = 'u32[144,128]{1,0:T(1,128)}', space=vmem, size = 0x12000, scoped, tag = 'internal scratch']
  %s0 = inlined_call_operand.hbm [shape: f32[8,16], index: 0, kind: input, shape index: {}]
  %s1 = inlined_call_operand.hbm [shape: f32[368,128], index: 1, kind: input, shape index: {}]
  %s2 = inlined_call_operand.hbm [shape: f32[8,128], index: 2, kind: output, shape index: {}]
  %s3 = sld [smem:[#allocation0]]
  $region26: #{_unity_forward_device.1} parent=0
    _
  %s5 = ssub.s32 1, %s3
  %s6 = scalar_select 0, %s5, %s3
  $region1: #{_unity_forward_device.1} parent=0
    #allocation2 [shape = 'u8[4096]{0}', space=vmem, size = 0x1000, scoped, tag = 'input window, operand 0, single buffered']
    #allocation3 [shape = 's32[1]{0}', space=sflag, size = 0x4, scoped, tag = 'scoped memory for _unity_forward_device.1']
    #allocation4 [shape = 's32[1]{0}', space=sflag, size = 0x4, scoped, tag = 'scoped memory for _unity_forward_device.1']
    #allocation5 [shape = 'u8[188416]{0}', space=vmem, size = 0x2e000, scoped, tag = 'input window, operand 1, single buffered']
    #allocation6 [shape = 's32[1]{0}', space=sflag, size = 0x4, scoped, tag = 'scoped memory for _unity_forward_device.1']
    #allocation7 [shape = 'u8[4096]{0}', space=vmem, size = 0x1000, scoped, tag = 'output window, operand 0, single buffered']
    %7 = vsyncpa [#allocation3], 0
    %8 = vsyncpa [#allocation6], 0
    %9 = vsyncpa [#allocation4], 0
    // Predicated region
    $region2: #{_unity_forward_device.1} parent=1 // pred_check
      _
    $region3: #{_unity_forward_device.1} parent=1 // pred_check_branch
      %11 = sbr.rel (0) target = $region5
    $region4: #{_unity_forward_device.1} parent=1 // pred_region
      %s13 = ssub.s32 128, 128
      %14 = vsyncadd [#allocation3], %s13
      %s16 = sshll.u32 [#allocation2], 4
      %s17 = int_to_ptr.vmem [resolvable:$true] %s16
      %19 = dma.hbm_to_vmem [thread:$0]  %s0, 128, %s17, [#allocation3]
    $region5: #{_unity_forward_device.1} parent=1 // pred_fallthru
      _
    // Predicated region
    $region6: #{_unity_forward_device.1} parent=1 // pred_check
      _
    $region7: #{_unity_forward_device.1} parent=1 // pred_check_branch
      %21 = sbr.rel (0) target = $region9
    $region8: #{_unity_forward_device.1} parent=1 // pred_region
      %s23 = ssub.s32 5888, 5888
      %24 = vsyncadd [#allocation6], %s23
      %s25 = sshll.u32 [#allocation5], 4
      %s26 = int_to_ptr.vmem [resolvable:$true] %s25
      %31 = dma.hbm_to_vmem [thread:$0]  %s1, 5888, %s26, [#allocation6], 128, 128, 8
    $region9: #{_unity_forward_device.1} parent=1 // pred_fallthru
      _
    // Predicated region
    $region10: #{_unity_forward_device.1} parent=1 // pred_check
      _
    $region11: #{_unity_forward_device.1} parent=1 // pred_check_branch
      %33 = sbr.rel (0) target = $region13
    $region12: #{_unity_forward_device.1} parent=1 // pred_region
      %34 = dma.done [#allocation3], 128
    $region13: #{_unity_forward_device.1} parent=1 // pred_fallthru
      _
    // Predicated region
    $region14: #{_unity_forward_device.1} parent=1 // pred_check
      _
    $region15: #{_unity_forward_device.1} parent=1 // pred_check_branch
      %36 = sbr.rel (0) target = $region17
    $region16: #{_unity_forward_device.1} parent=1 // pred_region
      %37 = dma.done [#allocation6], 5888
    $region17: #{_unity_forward_device.1} parent=1 // pred_fallthru
      _
    %v38 = vld [vmem:[#allocation2] sm:$0xff]
    %v39 = vld [vmem:[#allocation5] sm:$0xff]
    %v40 = vld [vmem:[#allocation5 + $0x8] sm:$0xff]
    %v41 = vld [vmem:[#allocation5 + $0x160] sm:$0x1]
    %v42 = vlaneseq
    %v43 = vshrl.u32 %v42, 7
    %v44 = vsub.s32 0, %v43
    %v45 = vrot.slane %v41, %v44
    %vm46 = vcmask 130048
    %v48 = vsel %vm46, %v38, 0
    %50 = vmatprep.subr.mxu0 0.0
    %51 = vmatpush1.msra.mxu0 %v39
    %52 = vmatprep.subr.mxu0 0.0
    %53 = vmatpush1.msra.mxu0 %v40
    %54 = vmatprep.subr.mxu0 0.0
    %55 = vmatpush1.msra.mxu0 0.0
    %56 = vmatprep.subr.mxu0 0.0
    %57 = vmatpush1.msra.mxu0 0.0
    %58 = vmatprep.subr.mxu0 0.0
    %59 = vmatpush1.msra.mxu0 0.0
    %60 = vmatprep.subr.mxu0 0.0
    %61 = vmatpush1.msra.mxu0 0.0
    %62 = vmatprep.subr.mxu0 0.0
    %63 = vmatpush1.msra.mxu0 0.0
    %64 = vmatprep.subr.mxu0 0.0
    %65 = vmatpush1.msra.mxu0 0.0
    %66 = vmatprep.subr.mxu0 0.0
    %67 = vmatpush1.msra.mxu0 0.0
    %68 = vmatprep.subr.mxu0 0.0
    %69 = vmatpush1.msra.mxu0 0.0
    %70 = vmatprep.subr.mxu0 0.0
    %71 = vmatpush1.msra.mxu0 0.0
    %72 = vmatprep.subr.mxu0 0.0
    %73 = vmatpush1.msra.mxu0 0.0
    %74 = vmatprep.subr.mxu0 0.0
    %75 = vmatpush1.msra.mxu0 0.0
    %76 = vmatprep.subr.mxu0 0.0
    %77 = vmatpush1.msra.mxu0 0.0
    %78 = vmatprep.subr.mxu0 0.0
    %79 = vmatpush1.msra.mxu0 0.0
    %80 = vmatprep.subr.mxu0 0.0
    %81 = vmatpush1.msra.mxu0 0.0
    %82 = vmatprep.subr.mxu0 0.0
    %83 = vmatpush1.msra.mxu0 0.0
    %84 = vmatprep.subr.mxu0 0.0
    %85 = vmatpush1.msra.mxu0 0.0
    %86 = vmatprep.subr.mxu0 0.0
    %87 = vmatpush1.msra.mxu0 0.0
    %88 = vmatprep.subr.mxu0 0.0
    %89 = vmatpush1.msra.mxu0 0.0
    %90 = vmatprep.subr.mxu0 0.0
    %91 = vmatpush1.msra.mxu0 0.0
    %92 = vmatprep.subr.mxu0 0.0
    %93 = vmatpush1.msra.mxu0 0.0
    %94 = vmatprep.subr.mxu0 0.0
    %95 = vmatpush1.msra.mxu0 0.0
    %96 = vmatprep.subr.mxu0 0.0
    %97 = vmatpush1.msra.mxu0 0.0
    %98 = vmatprep.subr.mxu0 0.0
    %99 = vmatpush1.msra.mxu0 0.0
    %100 = vmatprep.subr.mxu0 0.0
    %101 = vmatpush1.msra.mxu0 0.0
    %102 = vmatprep.subr.mxu0 0.0
    %103 = vmatpush1.msra.mxu0 0.0
    %104 = vmatprep.subr.mxu0 0.0
    %105 = vmatpush1.msra.mxu0 0.0
    %106 = vmatprep.subr.mxu0 0.0
    %107 = vmatpush1.msra.mxu0 0.0
    %108 = vmatprep.subr.mxu0 0.0
    %109 = vmatpush1.msra.mxu0 0.0
    %110 = vmatprep.subr.mxu0 0.0
    %111 = vmatpush1.msra.mxu0 0.0
    %112 = vmatprep.subr.mxu0 0.0
    %113 = vmatpush1.msra.mxu0 0.0
    %114 = vmatprep.mubr.f32.mxu0 0.0
    %115 = vmatmul.mubr.f32.gmra.mrb[0].mxu0 %v48
    %v116 = vpop.f32.mrb[0].mxu0
    %v117 = vadd.f32 %v45, %v116
    %v118 = vpop.f32.mrb[0].mxu0
    %119 = vdwg.mxu0
    %v120 = vlaneseq
    %v121 = vand.u32 %v120, 127
    %vm122 = vcmp.lt.s32.totalorder %v121, 32
    %v123 = vmul.f32 %v117, 0.5
    %v124 = vmul.f32 %v117, 0.70710677
    %v125 = verf.f32.pop %v124
    %v126 = vadd.f32 %v125, 1.0
    %v127 = vmul.f32 %v123, %v126
    %v128 = vmax.f32 %v117, 0.0
    %v129 = vsel %vm122, 1, 0
    %vm130 = vcmp.eq.s32.totalorder %v129, 1
    %v131 = vsel %vm130, %v127, %v128
    %v132 = vld [vmem:[#allocation5 + $0x10] sm:$0xff]
    %v133 = vld [vmem:[#allocation5 + $0x18] sm:$0xff]
    %v134 = vld [vmem:[#allocation5 + $0x20] sm:$0xff]
    %v135 = vld [vmem:[#allocation5 + $0x28] sm:$0xff]
    %v136 = vld [vmem:[#allocation5 + $0x30] sm:$0xff]
    %v137 = vld [vmem:[#allocation5 + $0x38] sm:$0xff]
    %v138 = vld [vmem:[#allocation5 + $0x40] sm:$0xff]
    %v139 = vld [vmem:[#allocation5 + $0x48] sm:$0xff]
    %v140 = vld [vmem:[#allocation5 + $0x50] sm:$0xff]
    %v141 = vld [vmem:[#allocation5 + $0x58] sm:$0xff]
    %v142 = vld [vmem:[#allocation5 + $0x161] sm:$0x1]
    %v143 = vlaneseq
    %v144 = vshrl.u32 %v143, 7
    %v145 = vsub.s32 0, %v144
    %v146 = vrot.slane %v142, %v145
    %vm147 = vcmask 654336
    %v149 = vsel %vm147, %v131, 0
    %151 = vmatprep.subr.mxu0 0.0
    %152 = vmatpush1.msra.mxu0 %v132
    %153 = vmatprep.subr.mxu0 0.0
    %154 = vmatpush1.msra.mxu0 %v133
    %155 = vmatprep.subr.mxu0 0.0
    %156 = vmatpush1.msra.mxu0 %v134
    %157 = vmatprep.subr.mxu0 0.0
    %158 = vmatpush1.msra.mxu0 %v135
    %159 = vmatprep.subr.mxu0 0.0
    %160 = vmatpush1.msra.mxu0 %v136
    %161 = vmatprep.subr.mxu0 0.0
    %162 = vmatpush1.msra.mxu0 %v137
    %163 = vmatprep.subr.mxu0 0.0
    %164 = vmatpush1.msra.mxu0 %v138
    %165 = vmatprep.subr.mxu0 0.0
    %166 = vmatpush1.msra.mxu0 %v139
    %167 = vmatprep.subr.mxu0 0.0
    %168 = vmatpush1.msra.mxu0 %v140
    %169 = vmatprep.subr.mxu0 0.0
    %170 = vmatpush1.msra.mxu0 %v141
    %171 = vmatprep.subr.mxu0 0.0
    %172 = vmatpush1.msra.mxu0 0.0
    %173 = vmatprep.subr.mxu0 0.0
    %174 = vmatpush1.msra.mxu0 0.0
    %175 = vmatprep.subr.mxu0 0.0
    %176 = vmatpush1.msra.mxu0 0.0
    %177 = vmatprep.subr.mxu0 0.0
    %178 = vmatpush1.msra.mxu0 0.0
    %179 = vmatprep.subr.mxu0 0.0
    %180 = vmatpush1.msra.mxu0 0.0
    %181 = vmatprep.subr.mxu0 0.0
    %182 = vmatpush1.msra.mxu0 0.0
    %183 = vmatprep.subr.mxu0 0.0
    %184 = vmatpush1.msra.mxu0 0.0
    %185 = vmatprep.subr.mxu0 0.0
    %186 = vmatpush1.msra.mxu0 0.0
    %187 = vmatprep.subr.mxu0 0.0
    %188 = vmatpush1.msra.mxu0 0.0
    %189 = vmatprep.subr.mxu0 0.0
    %190 = vmatpush1.msra.mxu0 0.0
    %191 = vmatprep.subr.mxu0 0.0
    %192 = vmatpush1.msra.mxu0 0.0
    %193 = vmatprep.subr.mxu0 0.0
    %194 = vmatpush1.msra.mxu0 0.0
    %195 = vmatprep.subr.mxu0 0.0
    %196 = vmatpush1.msra.mxu0 0.0
    %197 = vmatprep.subr.mxu0 0.0
    %198 = vmatpush1.msra.mxu0 0.0
    %199 = vmatprep.subr.mxu0 0.0
    %200 = vmatpush1.msra.mxu0 0.0
    %201 = vmatprep.subr.mxu0 0.0
    %202 = vmatpush1.msra.mxu0 0.0
    %203 = vmatprep.subr.mxu0 0.0
    %204 = vmatpush1.msra.mxu0 0.0
    %205 = vmatprep.subr.mxu0 0.0
    %206 = vmatpush1.msra.mxu0 0.0
    %207 = vmatprep.subr.mxu0 0.0
    %208 = vmatpush1.msra.mxu0 0.0
    %209 = vmatprep.subr.mxu0 0.0
    %210 = vmatpush1.msra.mxu0 0.0
    %211 = vmatprep.subr.mxu0 0.0
    %212 = vmatpush1.msra.mxu0 0.0
    %213 = vmatprep.subr.mxu0 0.0
    %214 = vmatpush1.msra.mxu0 0.0
    %215 = vmatprep.mubr.f32.mxu0 0.0
    %216 = vmatmul.mubr.f32.gmra.mrb[0].mxu0 %v149
    %v217 = vpop.f32.mrb[0].mxu0
    %v218 = vadd.f32 %v146, %v217
    %v219 = vpop.f32.mrb[0].mxu0
    %220 = vdwg.mxu0
    %vm221 = vcmask 523264
    %v222 = vsel %vm221, %v218, 0.0
    %223 = vadd.xlane.f32.xlu0 %v222
    %v224 = vpop.xlane.xlu0 %223
    %v225 = vrcp.pop 64.0
    %v226 = vmul.f32 %v224, %v225
    %v227 = vsub.f32 %v218, %v226
    %v228 = vmul.f32 %v227, %v227
    %v229 = vsel %vm221, %v228, 0.0
    %230 = vadd.xlane.f32.xlu0 %v229
    %v231 = vpop.xlane.xlu0 %230
    %v232 = vmul.f32 %v231, %v225
    %v233 = vadd.f32 %v232, 1e-05
    %v234 = vrsqrt.pop %v233
    %v235 = vmul.f32 %v227, %v234
    %v236 = vld [vmem:[#allocation5 + $0x162] sm:$0x1]
    %v237 = vlaneseq
    %v238 = vshrl.u32 %v237, 7
    %v239 = vsub.s32 0, %v238
    %v240 = vrot.slane %v236, %v239
    %v241 = vmul.f32 %v235, %v240
    %v242 = vld [vmem:[#allocation5 + $0x163] sm:$0x1]
    %v243 = vlaneseq
    %v244 = vshrl.u32 %v243, 7
    %v245 = vsub.s32 0, %v244
    %v246 = vrot.slane %v242, %v245
    %v247 = vadd.f32 %v241, %v246
    %v248 = vmul.f32 %v247, 0.5
    %v249 = vmul.f32 %v247, 0.70710677
    %v250 = verf.f32.pop %v249
    %v251 = vadd.f32 %v250, 1.0
    %v252 = vmul.f32 %v248, %v251
    %vm253 = vcmask 785920
    %v254 = vsel %vm253, %v218, 0.0
    %v255 = vrot.slane %v254, 4
    %v256 = vadd.f32 %v254, %v255
    %v257 = vrot.slane %v256, 2
    %v258 = vadd.f32 %v256, %v257
    %v259 = vrot.slane %v258, 1
    %v260 = vadd.f32 %v258, %v259
    %v261 = vrcp.pop 8.0
    %v262 = vmul.f32 %v260, %v261
    %v263 = vsub.f32 %v218, %v262
    %v264 = vmul.f32 %v263, %v263
    %v265 = vsel %vm253, %v264, 0.0
    %v266 = vrot.slane %v265, 4
    %v267 = vadd.f32 %v265, %v266
    %v268 = vrot.slane %v267, 2
    %v269 = vadd.f32 %v267, %v268
    %v270 = vrot.slane %v269, 1
    %v271 = vadd.f32 %v269, %v270
    %v272 = vmul.f32 %v271, %v261
    %v273 = vadd.f32 %v272, 1e-05
    %v274 = vrsqrt.pop %v273
    %v275 = vmul.f32 %v263, %v274
    %v276 = vld [vmem:[#allocation5 + $0x164] sm:$0x1]
    %v277 = vlaneseq
    %v278 = vshrl.u32 %v277, 7
    %v279 = vsub.s32 0, %v278
    %v280 = vrot.slane %v276, %v279
    %282 = vrot.lane.b32.xlu0 %v280, 64
    %v283 = vpop.permute.xlu0 %282
    %v285 = vmul.f32 %v275, %v283
    %v286 = vld [vmem:[#allocation5 + $0x165] sm:$0x1]
    %v287 = vlaneseq
    %v288 = vshrl.u32 %v287, 7
    %v289 = vsub.s32 0, %v288
    %v290 = vrot.slane %v286, %v289
    %292 = vrot.lane.b32.xlu0 %v290, 64
    %v293 = vpop.permute.xlu0 %292
    %v295 = vadd.f32 %v285, %v293
    %v296 = vmax.f32 %v295, 0.0
    %v297 = vsel %vm221, %v252, %v296
    %v298 = vld [vmem:[#allocation5 + $0x60] sm:$0xff]
    %v299 = vld [vmem:[#allocation5 + $0x68] sm:$0xff]
    %v300 = vld [vmem:[#allocation5 + $0x70] sm:$0xff]
    %v301 = vld [vmem:[#allocation5 + $0x78] sm:$0xff]
    %v302 = vld [vmem:[#allocation5 + $0x80] sm:$0xff]
    %v303 = vld [vmem:[#allocation5 + $0x88] sm:$0xff]
    %v304 = vld [vmem:[#allocation5 + $0x90] sm:$0xff]
    %v305 = vld [vmem:[#allocation5 + $0x98] sm:$0xff]
    %v306 = vld [vmem:[#allocation5 + $0xa0] sm:$0xff]
    %v307 = vld [vmem:[#allocation5 + $0xa8] sm:$0xff]
    %v308 = vld [vmem:[#allocation5 + $0xb0] sm:$0xff]
    %v309 = vld [vmem:[#allocation5 + $0xb8] sm:$0xff]
    %v310 = vld [vmem:[#allocation5 + $0x166] sm:$0x1]
    %v311 = vlaneseq
    %v312 = vshrl.u32 %v311, 7
    %v313 = vsub.s32 0, %v312
    %v314 = vrot.slane %v310, %v313
    %vm315 = vcmask 785408
    %v317 = vsel %vm315, %v297, 0
    %319 = vmatprep.subr.mxu0 0.0
    %320 = vmatpush1.msra.mxu0 %v298
    %321 = vmatprep.subr.mxu0 0.0
    %322 = vmatpush1.msra.mxu0 %v299
    %323 = vmatprep.subr.mxu0 0.0
    %324 = vmatpush1.msra.mxu0 %v300
    %325 = vmatprep.subr.mxu0 0.0
    %326 = vmatpush1.msra.mxu0 %v301
    %327 = vmatprep.subr.mxu0 0.0
    %328 = vmatpush1.msra.mxu0 %v302
    %329 = vmatprep.subr.mxu0 0.0
    %330 = vmatpush1.msra.mxu0 %v303
    %331 = vmatprep.subr.mxu0 0.0
    %332 = vmatpush1.msra.mxu0 %v304
    %333 = vmatprep.subr.mxu0 0.0
    %334 = vmatpush1.msra.mxu0 %v305
    %335 = vmatprep.subr.mxu0 0.0
    %336 = vmatpush1.msra.mxu0 %v306
    %337 = vmatprep.subr.mxu0 0.0
    %338 = vmatpush1.msra.mxu0 %v307
    %339 = vmatprep.subr.mxu0 0.0
    %340 = vmatpush1.msra.mxu0 %v308
    %341 = vmatprep.subr.mxu0 0.0
    %342 = vmatpush1.msra.mxu0 %v309
    %343 = vmatprep.subr.mxu0 0.0
    %344 = vmatpush1.msra.mxu0 0.0
    %345 = vmatprep.subr.mxu0 0.0
    %346 = vmatpush1.msra.mxu0 0.0
    %347 = vmatprep.subr.mxu0 0.0
    %348 = vmatpush1.msra.mxu0 0.0
    %349 = vmatprep.subr.mxu0 0.0
    %350 = vmatpush1.msra.mxu0 0.0
    %351 = vmatprep.subr.mxu0 0.0
    %352 = vmatpush1.msra.mxu0 0.0
    %353 = vmatprep.subr.mxu0 0.0
    %354 = vmatpush1.msra.mxu0 0.0
    %355 = vmatprep.subr.mxu0 0.0
    %356 = vmatpush1.msra.mxu0 0.0
    %357 = vmatprep.subr.mxu0 0.0
    %358 = vmatpush1.msra.mxu0 0.0
    %359 = vmatprep.subr.mxu0 0.0
    %360 = vmatpush1.msra.mxu0 0.0
    %361 = vmatprep.subr.mxu0 0.0
    %362 = vmatpush1.msra.mxu0 0.0
    %363 = vmatprep.subr.mxu0 0.0
    %364 = vmatpush1.msra.mxu0 0.0
    %365 = vmatprep.subr.mxu0 0.0
    %366 = vmatpush1.msra.mxu0 0.0
    %367 = vmatprep.subr.mxu0 0.0
    %368 = vmatpush1.msra.mxu0 0.0
    %369 = vmatprep.subr.mxu0 0.0
    %370 = vmatpush1.msra.mxu0 0.0
    %371 = vmatprep.subr.mxu0 0.0
    %372 = vmatpush1.msra.mxu0 0.0
    %373 = vmatprep.subr.mxu0 0.0
    %374 = vmatpush1.msra.mxu0 0.0
    %375 = vmatprep.subr.mxu0 0.0
    %376 = vmatpush1.msra.mxu0 0.0
    %377 = vmatprep.subr.mxu0 0.0
    %378 = vmatpush1.msra.mxu0 0.0
    %379 = vmatprep.subr.mxu0 0.0
    %380 = vmatpush1.msra.mxu0 0.0
    %381 = vmatprep.subr.mxu0 0.0
    %382 = vmatpush1.msra.mxu0 0.0
    %383 = vmatprep.mubr.f32.mxu0 0.0
    %384 = vmatmul.mubr.f32.gmra.mrb[0].mxu0 %v317
    %v385 = vpop.f32.mrb[0].mxu0
    %v386 = vadd.f32 %v314, %v385
    %v387 = vpop.f32.mrb[0].mxu0
    %388 = vdwg.mxu0
    %v389 = vmax.f32 %v386, 0.0
    %v390 = vand.u32 2147483647, %v386
    %v391 = vsub.f32 0.0, %v390
    %v392 = vmul.f32 %v391, 1.442695
    %v393 = vpow.pop %v392
    %v394 = vadd.f32 %v393, 1.0
    %v395 = vlog2.pop %v394
    %v396 = vmul.f32 %v395, 0.6931472
    %v397 = vadd.f32 %v389, %v396
    %vm398 = vcmp.lt.s32.totalorder %v121, 16
    %v399 = vtanh.pop %v386
    %v400 = vsel %vm398, 1, 0
    %vm401 = vcmp.eq.s32.totalorder %v400, 1
    %v402 = vsel %vm401, %v399, %v397
    %v403 = vld [vmem:[#allocation5 + $0x120] sm:$0xff]
    %v404 = vld [vmem:[#allocation5 + $0x128] sm:$0xff]
    %v405 = vld [vmem:[#allocation5 + $0x130] sm:$0xff]
    %v406 = vld [vmem:[#allocation5 + $0x138] sm:$0xff]
    %v407 = vld [vmem:[#allocation5 + $0x140] sm:$0xff]
    %v408 = vld [vmem:[#allocation5 + $0x148] sm:$0xff]
    %v409 = vld [vmem:[#allocation5 + $0x150] sm:$0xff]
    %v410 = vld [vmem:[#allocation5 + $0x158] sm:$0xff]
    %419 = vrot.lane.b32.xlu0 %v403, 80
    %v420 = vpop.permute.xlu0 %419
    %421 = vrot.lane.b32.xlu0 %v404, 80
    %v422 = vpop.permute.xlu0 %421
    %423 = vrot.lane.b32.xlu0 %v405, 80
    %v424 = vpop.permute.xlu0 %423
    %425 = vrot.lane.b32.xlu0 %v406, 80
    %v426 = vpop.permute.xlu0 %425
    %427 = vrot.lane.b32.xlu0 %v407, 80
    %v428 = vpop.permute.xlu0 %427
    %429 = vrot.lane.b32.xlu0 %v408, 80
    %v430 = vpop.permute.xlu0 %429
    %431 = vrot.lane.b32.xlu0 %v409, 80
    %v432 = vpop.permute.xlu0 %431
    %433 = vrot.lane.b32.xlu0 %v410, 80
    %v434 = vpop.permute.xlu0 %433
    %v443 = vmul.f32 %v117, %v420
    %v444 = vmul.f32 %v117, %v422
    %v445 = vmul.f32 %v117, %v424
    %v446 = vmul.f32 %v117, %v426
    %v447 = vmul.f32 %v117, %v428
    %v448 = vmul.f32 %v117, %v430
    %v449 = vmul.f32 %v117, %v432
    %v450 = vmul.f32 %v117, %v434
    %459 = vrot.lane.b32.xlu0 %v443, 48
    %v460 = vpop.permute.xlu0 %459
    %461 = vrot.lane.b32.xlu0 %v444, 48
    %v462 = vpop.permute.xlu0 %461
    %463 = vrot.lane.b32.xlu0 %v445, 48
    %v464 = vpop.permute.xlu0 %463
    %465 = vrot.lane.b32.xlu0 %v446, 48
    %v466 = vpop.permute.xlu0 %465
    %467 = vrot.lane.b32.xlu0 %v447, 48
    %v468 = vpop.permute.xlu0 %467
    %469 = vrot.lane.b32.xlu0 %v448, 48
    %v470 = vpop.permute.xlu0 %469
    %471 = vrot.lane.b32.xlu0 %v449, 48
    %v472 = vpop.permute.xlu0 %471
    %473 = vrot.lane.b32.xlu0 %v450, 48
    %v474 = vpop.permute.xlu0 %473
    %476 = vrot.lane.b32.xlu0 %v117, 32
    %v477 = vpop.permute.xlu0 %476
    %v478 = vsel %vm46, %v460, 0
    %v480 = vsel %vm46, %v462, 0
    %v482 = vsel %vm46, %v464, 0
    %v484 = vsel %vm46, %v466, 0
    %v486 = vsel %vm46, %v468, 0
    %v488 = vsel %vm46, %v470, 0
    %v490 = vsel %vm46, %v472, 0
    %v492 = vsel %vm46, %v474, 0
    %v494 = vsel %vm46, %v477, 0
    %496 = vmatprep.subr.mxu0 0.0
    %497 = vmatpush1.xpose.msra.mxu0 %v494
    %498 = vmatprep.subr.mxu0 0.0
    %499 = vmatpush1.xpose.msra.mxu0 0.0
    %500 = vmatprep.subr.mxu0 0.0
    %501 = vmatpush1.xpose.msra.mxu0 0.0
    %502 = vmatprep.subr.mxu0 0.0
    %503 = vmatpush1.xpose.msra.mxu0 0.0
    %504 = vmatprep.subr.mxu0 0.0
    %505 = vmatpush1.xpose.msra.mxu0 0.0
    %506 = vmatprep.subr.mxu0 0.0
    %507 = vmatpush1.xpose.msra.mxu0 0.0
    %508 = vmatprep.subr.mxu0 0.0
    %509 = vmatpush1.xpose.msra.mxu0 0.0
    %510 = vmatprep.subr.mxu0 0.0
    %511 = vmatpush1.xpose.msra.mxu0 0.0
    %512 = vmatprep.subr.mxu0 0.0
    %513 = vmatpush1.xpose.msra.mxu0 0.0
    %514 = vmatprep.subr.mxu0 0.0
    %515 = vmatpush1.xpose.msra.mxu0 0.0
    %516 = vmatprep.subr.mxu0 0.0
    %517 = vmatpush1.xpose.msra.mxu0 0.0
    %518 = vmatprep.subr.mxu0 0.0
    %519 = vmatpush1.xpose.msra.mxu0 0.0
    %520 = vmatprep.subr.mxu0 0.0
    %521 = vmatpush1.xpose.msra.mxu0 0.0
    %522 = vmatprep.subr.mxu0 0.0
    %523 = vmatpush1.xpose.msra.mxu0 0.0
    %524 = vmatprep.subr.mxu0 0.0
    %525 = vmatpush1.xpose.msra.mxu0 0.0
    %526 = vmatprep.subr.mxu0 0.0
    %527 = vmatpush1.xpose.msra.mxu0 0.0
    %528 = vmatprep.subr.mxu0 0.0
    %529 = vmatpush1.xpose.msra.mxu0 0.0
    %530 = vmatprep.subr.mxu0 0.0
    %531 = vmatpush1.xpose.msra.mxu0 0.0
    %532 = vmatprep.subr.mxu0 0.0
    %533 = vmatpush1.xpose.msra.mxu0 0.0
    %534 = vmatprep.subr.mxu0 0.0
    %535 = vmatpush1.xpose.msra.mxu0 0.0
    %536 = vmatprep.subr.mxu0 0.0
    %537 = vmatpush1.xpose.msra.mxu0 0.0
    %538 = vmatprep.subr.mxu0 0.0
    %539 = vmatpush1.xpose.msra.mxu0 0.0
    %540 = vmatprep.subr.mxu0 0.0
    %541 = vmatpush1.xpose.msra.mxu0 0.0
    %542 = vmatprep.subr.mxu0 0.0
    %543 = vmatpush1.xpose.msra.mxu0 0.0
    %544 = vmatprep.subr.mxu0 0.0
    %545 = vmatpush1.xpose.msra.mxu0 0.0
    %546 = vmatprep.subr.mxu0 0.0
    %547 = vmatpush1.xpose.msra.mxu0 0.0
    %548 = vmatprep.subr.mxu0 0.0
    %549 = vmatpush1.xpose.msra.mxu0 0.0
    %550 = vmatprep.subr.mxu0 0.0
    %551 = vmatpush1.xpose.msra.mxu0 0.0
    %552 = vmatprep.subr.mxu0 0.0
    %553 = vmatpush1.xpose.msra.mxu0 0.0
    %554 = vmatprep.subr.mxu0 0.0
    %555 = vmatpush1.xpose.msra.mxu0 0.0
    %556 = vmatprep.subr.mxu0 0.0
    %557 = vmatpush1.xpose.msra.mxu0 0.0
    %558 = vmatprep.subr.mxu0 0.0
    %559 = vmatpush1.xpose.msra.mxu0 0.0
    %560 = vmatprep.mubr.f32.mxu0 0.0
    %561 = vmatmul.mubr.f32.gmra.mrb[0].mxu0 %v478
    %v562 = vpop.f32.mrb[0].mxu0
    %v563 = vadd.f32 0.0, %v562
    %v564 = vpop.f32.mrb[0].mxu0
    %565 = vmatprep.mubr.f32.mxu0 0.0
    %566 = vmatmul.mubr.f32.gmra.mrb[0].mxu0 %v480
    %v567 = vpop.f32.mrb[0].mxu0
    %v568 = vadd.f32 0.0, %v567
    %v569 = vpop.f32.mrb[0].mxu0
    %570 = vmatprep.mubr.f32.mxu0 0.0
    %571 = vmatmul.mubr.f32.gmra.mrb[0].mxu0 %v482
    %v572 = vpop.f32.mrb[0].mxu0
    %v573 = vadd.f32 0.0, %v572
    %v574 = vpop.f32.mrb[0].mxu0
    %575 = vmatprep.mubr.f32.mxu0 0.0
    %576 = vmatmul.mubr.f32.gmra.mrb[0].mxu0 %v484
    %v577 = vpop.f32.mrb[0].mxu0
    %v578 = vadd.f32 0.0, %v577
    %v579 = vpop.f32.mrb[0].mxu0
    %580 = vmatprep.mubr.f32.mxu0 0.0
    %581 = vmatmul.mubr.f32.gmra.mrb[0].mxu0 %v486
    %v582 = vpop.f32.mrb[0].mxu0
    %v583 = vadd.f32 0.0, %v582
    %v584 = vpop.f32.mrb[0].mxu0
    %585 = vmatprep.mubr.f32.mxu0 0.0
    %586 = vmatmul.mubr.f32.gmra.mrb[0].mxu0 %v488
    %v587 = vpop.f32.mrb[0].mxu0
    %v588 = vadd.f32 0.0, %v587
    %v589 = vpop.f32.mrb[0].mxu0
    %590 = vmatprep.mubr.f32.mxu0 0.0
    %591 = vmatmul.mubr.f32.gmra.mrb[0].mxu0 %v490
    %v592 = vpop.f32.mrb[0].mxu0
    %v593 = vadd.f32 0.0, %v592
    %v594 = vpop.f32.mrb[0].mxu0
    %595 = vmatprep.mubr.f32.mxu0 0.0
    %596 = vmatmul.mubr.f32.gmra.mrb[0].mxu0 %v492
    %v597 = vpop.f32.mrb[0].mxu0
    %v598 = vadd.f32 0.0, %v597
    %v599 = vpop.f32.mrb[0].mxu0
    %600 = vdwg.mxu0
    %v601 = vmul.f32 %v563, 0.70710677
    %v602 = vmul.f32 %v568, 0.70710677
    %v603 = vmul.f32 %v573, 0.70710677
    %v604 = vmul.f32 %v578, 0.70710677
    %v605 = vmul.f32 %v583, 0.70710677
    %v606 = vmul.f32 %v588, 0.70710677
    %v607 = vmul.f32 %v593, 0.70710677
    %v608 = vmul.f32 %v598, 0.70710677
    %vm609 = vcmask 64512
    %v610 = vsel %vm609, %v601, -inf
    %611 = vmax.xlane.f32.xlu0 %v610
    %v612 = vpop.xlane.xlu0 %611
    %v613 = vsel %vm609, %v602, -inf
    %614 = vmax.xlane.f32.xlu0 %v613
    %v615 = vpop.xlane.xlu0 %614
    %v616 = vsel %vm609, %v603, -inf
    %617 = vmax.xlane.f32.xlu0 %v616
    %v618 = vpop.xlane.xlu0 %617
    %v619 = vsel %vm609, %v604, -inf
    %620 = vmax.xlane.f32.xlu0 %v619
    %v621 = vpop.xlane.xlu0 %620
    %v622 = vsel %vm609, %v605, -inf
    %623 = vmax.xlane.f32.xlu0 %v622
    %v624 = vpop.xlane.xlu0 %623
    %v625 = vsel %vm609, %v606, -inf
    %626 = vmax.xlane.f32.xlu0 %v625
    %v627 = vpop.xlane.xlu0 %626
    %v628 = vsel %vm609, %v607, -inf
    %629 = vmax.xlane.f32.xlu0 %v628
    %v630 = vpop.xlane.xlu0 %629
    %v631 = vsel %vm609, %v608, -inf
    %632 = vmax.xlane.f32.xlu0 %v631
    %v633 = vpop.xlane.xlu0 %632
    %v634 = vsub.f32 %v601, %v612
    %v635 = vsub.f32 %v602, %v615
    %v636 = vsub.f32 %v603, %v618
    %v637 = vsub.f32 %v604, %v621
    %v638 = vsub.f32 %v605, %v624
    %v639 = vsub.f32 %v606, %v627
    %v640 = vsub.f32 %v607, %v630
    %v641 = vsub.f32 %v608, %v633
    %v642 = vmul.f32 %v634, 1.442695
    %v643 = vpow.pop %v642
    %v644 = vmul.f32 %v635, 1.442695
    %v645 = vpow.pop %v644
    %v646 = vmul.f32 %v636, 1.442695
    %v647 = vpow.pop %v646
    %v648 = vmul.f32 %v637, 1.442695
    %v649 = vpow.pop %v648
    %v650 = vmul.f32 %v638, 1.442695
    %v651 = vpow.pop %v650
    %v652 = vmul.f32 %v639, 1.442695
    %v653 = vpow.pop %v652
    %v654 = vmul.f32 %v640, 1.442695
    %v655 = vpow.pop %v654
    %v656 = vmul.f32 %v641, 1.442695
    %v657 = vpow.pop %v656
    %v658 = vsel %vm609, %v643, 0.0
    %659 = vadd.xlane.f32.xlu0 %v658
    %v660 = vpop.xlane.xlu0 %659
    %v661 = vsel %vm609, %v645, 0.0
    %662 = vadd.xlane.f32.xlu0 %v661
    %v663 = vpop.xlane.xlu0 %662
    %v664 = vsel %vm609, %v647, 0.0
    %665 = vadd.xlane.f32.xlu0 %v664
    %v666 = vpop.xlane.xlu0 %665
    %v667 = vsel %vm609, %v649, 0.0
    %668 = vadd.xlane.f32.xlu0 %v667
    %v669 = vpop.xlane.xlu0 %668
    %v670 = vsel %vm609, %v651, 0.0
    %671 = vadd.xlane.f32.xlu0 %v670
    %v672 = vpop.xlane.xlu0 %671
    %v673 = vsel %vm609, %v653, 0.0
    %674 = vadd.xlane.f32.xlu0 %v673
    %v675 = vpop.xlane.xlu0 %674
    %v676 = vsel %vm609, %v655, 0.0
    %677 = vadd.xlane.f32.xlu0 %v676
    %v678 = vpop.xlane.xlu0 %677
    %v679 = vsel %vm609, %v657, 0.0
    %680 = vadd.xlane.f32.xlu0 %v679
    %v681 = vpop.xlane.xlu0 %680
    %v682 = vrcp.pop %v660
    %v683 = vmul.f32 %v643, %v682
    %v684 = vrcp.pop %v663
    %v685 = vmul.f32 %v645, %v684
    %v686 = vrcp.pop %v666
    %v687 = vmul.f32 %v647, %v686
    %v688 = vrcp.pop %v669
    %v689 = vmul.f32 %v649, %v688
    %v690 = vrcp.pop %v672
    %v691 = vmul.f32 %v651, %v690
    %v692 = vrcp.pop %v675
    %v693 = vmul.f32 %v653, %v692
    %v694 = vrcp.pop %v678
    %v695 = vmul.f32 %v655, %v694
    %v696 = vrcp.pop %v681
    %v697 = vmul.f32 %v657, %v696
    %698 = vrot.lane.b32.xlu0 %v117, 16
    %v699 = vpop.permute.xlu0 %698
    %v702 = vsel %vm609, %v683, 0
    %v705 = vsel %vm609, %v685, 0
    %v708 = vsel %vm609, %v687, 0
    %v711 = vsel %vm609, %v689, 0
    %v714 = vsel %vm609, %v691, 0
    %v717 = vsel %vm609, %v693, 0
    %v720 = vsel %vm609, %v695, 0
    %v723 = vsel %vm609, %v697, 0
    %725 = vmatprep.subr.mxu0 0.0
    %726 = vmatpush1.msra.mxu0 %v699
    %727 = vmatprep.subr.mxu0 0.0
    %728 = vmatpush1.msra.mxu0 0.0
    %729 = vmatprep.subr.mxu0 0.0
    %730 = vmatpush1.msra.mxu0 0.0
    %731 = vmatprep.subr.mxu0 0.0
    %732 = vmatpush1.msra.mxu0 0.0
    %733 = vmatprep.subr.mxu0 0.0
    %734 = vmatpush1.msra.mxu0 0.0
    %735 = vmatprep.subr.mxu0 0.0
    %736 = vmatpush1.msra.mxu0 0.0
    %737 = vmatprep.subr.mxu0 0.0
    %738 = vmatpush1.msra.mxu0 0.0
    %739 = vmatprep.subr.mxu0 0.0
    %740 = vmatpush1.msra.mxu0 0.0
    %741 = vmatprep.subr.mxu0 0.0
    %742 = vmatpush1.msra.mxu0 0.0
    %743 = vmatprep.subr.mxu0 0.0
    %744 = vmatpush1.msra.mxu0 0.0
    %745 = vmatprep.subr.mxu0 0.0
    %746 = vmatpush1.msra.mxu0 0.0
    %747 = vmatprep.subr.mxu0 0.0
    %748 = vmatpush1.msra.mxu0 0.0
    %749 = vmatprep.subr.mxu0 0.0
    %750 = vmatpush1.msra.mxu0 0.0
    %751 = vmatprep.subr.mxu0 0.0
    %752 = vmatpush1.msra.mxu0 0.0
    %753 = vmatprep.subr.mxu0 0.0
    %754 = vmatpush1.msra.mxu0 0.0
    %755 = vmatprep.subr.mxu0 0.0
    %756 = vmatpush1.msra.mxu0 0.0
    %757 = vmatprep.subr.mxu0 0.0
    %758 = vmatpush1.msra.mxu0 0.0
    %759 = vmatprep.subr.mxu0 0.0
    %760 = vmatpush1.msra.mxu0 0.0
    %761 = vmatprep.subr.mxu0 0.0
    %762 = vmatpush1.msra.mxu0 0.0
    %763 = vmatprep.subr.mxu0 0.0
    %764 = vmatpush1.msra.mxu0 0.0
    %765 = vmatprep.subr.mxu0 0.0
    %766 = vmatpush1.msra.mxu0 0.0
    %767 = vmatprep.subr.mxu0 0.0
    %768 = vmatpush1.msra.mxu0 0.0
    %769 = vmatprep.subr.mxu0 0.0
    %770 = vmatpush1.msra.mxu0 0.0
    %771 = vmatprep.subr.mxu0 0.0
    %772 = vmatpush1.msra.mxu0 0.0
    %773 = vmatprep.subr.mxu0 0.0
    %774 = vmatpush1.msra.mxu0 0.0
    %775 = vmatprep.subr.mxu0 0.0
    %776 = vmatpush1.msra.mxu0 0.0
    %777 = vmatprep.subr.mxu0 0.0
    %778 = vmatpush1.msra.mxu0 0.0
    %779 = vmatprep.subr.mxu0 0.0
    %780 = vmatpush1.msra.mxu0 0.0
    %781 = vmatprep.subr.mxu0 0.0
    %782 = vmatpush1.msra.mxu0 0.0
    %783 = vmatprep.subr.mxu0 0.0
    %784 = vmatpush1.msra.mxu0 0.0
    %785 = vmatprep.subr.mxu0 0.0
    %786 = vmatpush1.msra.mxu0 0.0
    %787 = vmatprep.subr.mxu0 0.0
    %788 = vmatpush1.msra.mxu0 0.0
    %789 = vmatprep.mubr.f32.mxu0 0.0
    %790 = vmatmul.mubr.f32.gmra.mrb[0].mxu0 %v702
    %v791 = vpop.f32.mrb[0].mxu0
    %v792 = vadd.f32 0.0, %v791
    %v793 = vpop.f32.mrb[0].mxu0
    %794 = vmatprep.mubr.f32.mxu0 0.0
    %795 = vmatmul.mubr.f32.gmra.mrb[0].mxu0 %v705
    %v796 = vpop.f32.mrb[0].mxu0
    %v797 = vadd.f32 0.0, %v796
    %v798 = vpop.f32.mrb[0].mxu0
    %799 = vmatprep.mubr.f32.mxu0 0.0
    %800 = vmatmul.mubr.f32.gmra.mrb[0].mxu0 %v708
    %v801 = vpop.f32.mrb[0].mxu0
    %v802 = vadd.f32 0.0, %v801
    %v803 = vpop.f32.mrb[0].mxu0
    %804 = vmatprep.mubr.f32.mxu0 0.0
    %805 = vmatmul.mubr.f32.gmra.mrb[0].mxu0 %v711
    %v806 = vpop.f32.mrb[0].mxu0
    %v807 = vadd.f32 0.0, %v806
    %v808 = vpop.f32.mrb[0].mxu0
    %809 = vmatprep.mubr.f32.mxu0 0.0
    %810 = vmatmul.mubr.f32.gmra.mrb[0].mxu0 %v714
    %v811 = vpop.f32.mrb[0].mxu0
    %v812 = vadd.f32 0.0, %v811
    %v813 = vpop.f32.mrb[0].mxu0
    %814 = vmatprep.mubr.f32.mxu0 0.0
    %815 = vmatmul.mubr.f32.gmra.mrb[0].mxu0 %v717
    %v816 = vpop.f32.mrb[0].mxu0
    %v817 = vadd.f32 0.0, %v816
    %v818 = vpop.f32.mrb[0].mxu0
    %819 = vmatprep.mubr.f32.mxu0 0.0
    %820 = vmatmul.mubr.f32.gmra.mrb[0].mxu0 %v720
    %v821 = vpop.f32.mrb[0].mxu0
    %v822 = vadd.f32 0.0, %v821
    %v823 = vpop.f32.mrb[0].mxu0
    %824 = vmatprep.mubr.f32.mxu0 0.0
    %825 = vmatmul.mubr.f32.gmra.mrb[0].mxu0 %v723
    %v826 = vpop.f32.mrb[0].mxu0
    %v827 = vadd.f32 0.0, %v826
    %v828 = vpop.f32.mrb[0].mxu0
    %829 = vdwg.mxu0
    %v830 = vmul.f32 %v792, %v403
    %v831 = vmul.f32 %v797, %v404
    %v832 = vmul.f32 %v802, %v405
    %v833 = vmul.f32 %v807, %v406
    %v834 = vmul.f32 %v812, %v407
    %v835 = vmul.f32 %v817, %v408
    %v836 = vmul.f32 %v822, %v409
    %v837 = vmul.f32 %v827, %v410
    %v838 = vadd.f32 %v830, 0.0
    %v839 = vadd.f32 %v838, %v831
    %v840 = vadd.f32 %v839, %v832
    %v841 = vadd.f32 %v840, %v833
    %v842 = vadd.f32 %v841, %v834
    %v843 = vadd.f32 %v842, %v835
    %v844 = vadd.f32 %v843, %v836
    %v845 = vadd.f32 %v844, %v837
    %v846 = vld [vmem:[#allocation5 + $0xc0] sm:$0xff]
    %v847 = vld [vmem:[#allocation5 + $0xc8] sm:$0xff]
    %v848 = vld [vmem:[#allocation5 + $0x167] sm:$0x1]
    %v849 = vlaneseq
    %v850 = vshrl.u32 %v849, 7
    %v851 = vsub.s32 0, %v850
    %v852 = vrot.slane %v848, %v851
    %v854 = vsel %vm46, %v845, 0
    %856 = vmatprep.subr.mxu0 0.0
    %857 = vmatpush1.msra.mxu0 %v846
    %858 = vmatprep.subr.mxu0 0.0
    %859 = vmatpush1.msra.mxu0 %v847
    %860 = vmatprep.subr.mxu0 0.0
    %861 = vmatpush1.msra.mxu0 0.0
    %862 = vmatprep.subr.mxu0 0.0
    %863 = vmatpush1.msra.mxu0 0.0
    %864 = vmatprep.subr.mxu0 0.0
    %865 = vmatpush1.msra.mxu0 0.0
    %866 = vmatprep.subr.mxu0 0.0
    %867 = vmatpush1.msra.mxu0 0.0
    %868 = vmatprep.subr.mxu0 0.0
    %869 = vmatpush1.msra.mxu0 0.0
    %870 = vmatprep.subr.mxu0 0.0
    %871 = vmatpush1.msra.mxu0 0.0
    %872 = vmatprep.subr.mxu0 0.0
    %873 = vmatpush1.msra.mxu0 0.0
    %874 = vmatprep.subr.mxu0 0.0
    %875 = vmatpush1.msra.mxu0 0.0
    %876 = vmatprep.subr.mxu0 0.0
    %877 = vmatpush1.msra.mxu0 0.0
    %878 = vmatprep.subr.mxu0 0.0
    %879 = vmatpush1.msra.mxu0 0.0
    %880 = vmatprep.subr.mxu0 0.0
    %881 = vmatpush1.msra.mxu0 0.0
    %882 = vmatprep.subr.mxu0 0.0
    %883 = vmatpush1.msra.mxu0 0.0
    %884 = vmatprep.subr.mxu0 0.0
    %885 = vmatpush1.msra.mxu0 0.0
    %886 = vmatprep.subr.mxu0 0.0
    %887 = vmatpush1.msra.mxu0 0.0
    %888 = vmatprep.subr.mxu0 0.0
    %889 = vmatpush1.msra.mxu0 0.0
    %890 = vmatprep.subr.mxu0 0.0
    %891 = vmatpush1.msra.mxu0 0.0
    %892 = vmatprep.subr.mxu0 0.0
    %893 = vmatpush1.msra.mxu0 0.0
    %894 = vmatprep.subr.mxu0 0.0
    %895 = vmatpush1.msra.mxu0 0.0
    %896 = vmatprep.subr.mxu0 0.0
    %897 = vmatpush1.msra.mxu0 0.0
    %898 = vmatprep.subr.mxu0 0.0
    %899 = vmatpush1.msra.mxu0 0.0
    %900 = vmatprep.subr.mxu0 0.0
    %901 = vmatpush1.msra.mxu0 0.0
    %902 = vmatprep.subr.mxu0 0.0
    %903 = vmatpush1.msra.mxu0 0.0
    %904 = vmatprep.subr.mxu0 0.0
    %905 = vmatpush1.msra.mxu0 0.0
    %906 = vmatprep.subr.mxu0 0.0
    %907 = vmatpush1.msra.mxu0 0.0
    %908 = vmatprep.subr.mxu0 0.0
    %909 = vmatpush1.msra.mxu0 0.0
    %910 = vmatprep.subr.mxu0 0.0
    %911 = vmatpush1.msra.mxu0 0.0
    %912 = vmatprep.subr.mxu0 0.0
    %913 = vmatpush1.msra.mxu0 0.0
    %914 = vmatprep.subr.mxu0 0.0
    %915 = vmatpush1.msra.mxu0 0.0
    %916 = vmatprep.subr.mxu0 0.0
    %917 = vmatpush1.msra.mxu0 0.0
    %918 = vmatprep.subr.mxu0 0.0
    %919 = vmatpush1.msra.mxu0 0.0
    %920 = vmatprep.mubr.f32.mxu0 0.0
    %921 = vmatmul.mubr.f32.gmra.mrb[0].mxu0 %v854
    %v922 = vpop.f32.mrb[0].mxu0
    %v923 = vadd.f32 %v852, %v922
    %v924 = vpop.f32.mrb[0].mxu0
    %925 = vdwg.mxu0
    %927 = vrot.lane.b32.xlu0 %v923, 32
    %v928 = vpop.permute.xlu0 %927
    %vm930 = vcmask 261120
    %v931 = vsel %vm930, %v402, %v928
    %v932 = vld [vmem:[#allocation5 + $0xd0] sm:$0xff]
    %v933 = vld [vmem:[#allocation5 + $0xd8] sm:$0xff]
    %v934 = vld [vmem:[#allocation5 + $0xe0] sm:$0xff]
    %v935 = vld [vmem:[#allocation5 + $0xe8] sm:$0xff]
    %v936 = vld [vmem:[#allocation5 + $0xf0] sm:$0xff]
    %v937 = vld [vmem:[#allocation5 + $0xf8] sm:$0xff]
    %v938 = vld [vmem:[#allocation5 + $0x168] sm:$0x1]
    %v939 = vlaneseq
    %v940 = vshrl.u32 %v939, 7
    %v941 = vsub.s32 0, %v940
    %v942 = vrot.slane %v938, %v941
    %vm943 = vcmask 392192
    %v945 = vsel %vm943, %v931, 0
    %947 = vmatprep.subr.mxu0 0.0
    %948 = vmatpush1.msra.mxu0 %v932
    %949 = vmatprep.subr.mxu0 0.0
    %950 = vmatpush1.msra.mxu0 %v933
    %951 = vmatprep.subr.mxu0 0.0
    %952 = vmatpush1.msra.mxu0 %v934
    %953 = vmatprep.subr.mxu0 0.0
    %954 = vmatpush1.msra.mxu0 %v935
    %955 = vmatprep.subr.mxu0 0.0
    %956 = vmatpush1.msra.mxu0 %v936
    %957 = vmatprep.subr.mxu0 0.0
    %958 = vmatpush1.msra.mxu0 %v937
    %959 = vmatprep.subr.mxu0 0.0
    %960 = vmatpush1.msra.mxu0 0.0
    %961 = vmatprep.subr.mxu0 0.0
    %962 = vmatpush1.msra.mxu0 0.0
    %963 = vmatprep.subr.mxu0 0.0
    %964 = vmatpush1.msra.mxu0 0.0
    %965 = vmatprep.subr.mxu0 0.0
    %966 = vmatpush1.msra.mxu0 0.0
    %967 = vmatprep.subr.mxu0 0.0
    %968 = vmatpush1.msra.mxu0 0.0
    %969 = vmatprep.subr.mxu0 0.0
    %970 = vmatpush1.msra.mxu0 0.0
    %971 = vmatprep.subr.mxu0 0.0
    %972 = vmatpush1.msra.mxu0 0.0
    %973 = vmatprep.subr.mxu0 0.0
    %974 = vmatpush1.msra.mxu0 0.0
    %975 = vmatprep.subr.mxu0 0.0
    %976 = vmatpush1.msra.mxu0 0.0
    %977 = vmatprep.subr.mxu0 0.0
    %978 = vmatpush1.msra.mxu0 0.0
    %979 = vmatprep.subr.mxu0 0.0
    %980 = vmatpush1.msra.mxu0 0.0
    %981 = vmatprep.subr.mxu0 0.0
    %982 = vmatpush1.msra.mxu0 0.0
    %983 = vmatprep.subr.mxu0 0.0
    %984 = vmatpush1.msra.mxu0 0.0
    %985 = vmatprep.subr.mxu0 0.0
    %986 = vmatpush1.msra.mxu0 0.0
    %987 = vmatprep.subr.mxu0 0.0
    %988 = vmatpush1.msra.mxu0 0.0
    %989 = vmatprep.subr.mxu0 0.0
    %990 = vmatpush1.msra.mxu0 0.0
    %991 = vmatprep.subr.mxu0 0.0
    %992 = vmatpush1.msra.mxu0 0.0
    %993 = vmatprep.subr.mxu0 0.0
    %994 = vmatpush1.msra.mxu0 0.0
    %995 = vmatprep.subr.mxu0 0.0
    %996 = vmatpush1.msra.mxu0 0.0
    %997 = vmatprep.subr.mxu0 0.0
    %998 = vmatpush1.msra.mxu0 0.0
    %999 = vmatprep.subr.mxu0 0.0
    %1000 = vmatpush1.msra.mxu0 0.0
    %1001 = vmatprep.subr.mxu0 0.0
    %1002 = vmatpush1.msra.mxu0 0.0
    %1003 = vmatprep.subr.mxu0 0.0
    %1004 = vmatpush1.msra.mxu0 0.0
    %1005 = vmatprep.subr.mxu0 0.0
    %1006 = vmatpush1.msra.mxu0 0.0
    %1007 = vmatprep.subr.mxu0 0.0
    %1008 = vmatpush1.msra.mxu0 0.0
    %1009 = vmatprep.subr.mxu0 0.0
    %1010 = vmatpush1.msra.mxu0 0.0
    %1011 = vmatprep.mubr.f32.mxu0 0.0
    %1012 = vmatmul.mubr.f32.gmra.mrb[0].mxu0 %v945
    %v1013 = vpop.f32.mrb[0].mxu0
    %v1014 = vadd.f32 %v942, %v1013
    %v1015 = vpop.f32.mrb[0].mxu0
    %1016 = vdwg.mxu0
    %v1017 = vmul.f32 %v1014, 0.5
    %v1018 = vmul.f32 %v1014, 0.70710677
    %v1019 = verf.f32.pop %v1018
    %v1020 = vadd.f32 %v1019, 1.0
    %v1021 = vmul.f32 %v1017, %v1020
    %v1022 = vld [vmem:[#allocation5 + $0x100] sm:$0xff]
    %v1023 = vld [vmem:[#allocation5 + $0x108] sm:$0xff]
    %v1024 = vld [vmem:[#allocation5 + $0x110] sm:$0xff]
    %v1025 = vld [vmem:[#allocation5 + $0x118] sm:$0xff]
    %v1026 = vld [vmem:[#allocation5 + $0x169] sm:$0x1]
    %v1027 = vlaneseq
    %v1028 = vshrl.u32 %v1027, 7
    %v1029 = vsub.s32 0, %v1028
    %v1030 = vrot.slane %v1026, %v1029
    %v1032 = vsel %vm930, %v1021, 0
    %1034 = vmatprep.subr.mxu0 0.0
    %1035 = vmatpush1.msra.mxu0 %v1022
    %1036 = vmatprep.subr.mxu0 0.0
    %1037 = vmatpush1.msra.mxu0 %v1023
    %1038 = vmatprep.subr.mxu0 0.0
    %1039 = vmatpush1.msra.mxu0 %v1024
    %1040 = vmatprep.subr.mxu0 0.0
    %1041 = vmatpush1.msra.mxu0 %v1025
    %1042 = vmatprep.subr.mxu0 0.0
    %1043 = vmatpush1.msra.mxu0 0.0
    %1044 = vmatprep.subr.mxu0 0.0
    %1045 = vmatpush1.msra.mxu0 0.0
    %1046 = vmatprep.subr.mxu0 0.0
    %1047 = vmatpush1.msra.mxu0 0.0
    %1048 = vmatprep.subr.mxu0 0.0
    %1049 = vmatpush1.msra.mxu0 0.0
    %1050 = vmatprep.subr.mxu0 0.0
    %1051 = vmatpush1.msra.mxu0 0.0
    %1052 = vmatprep.subr.mxu0 0.0
    %1053 = vmatpush1.msra.mxu0 0.0
    %1054 = vmatprep.subr.mxu0 0.0
    %1055 = vmatpush1.msra.mxu0 0.0
    %1056 = vmatprep.subr.mxu0 0.0
    %1057 = vmatpush1.msra.mxu0 0.0
    %1058 = vmatprep.subr.mxu0 0.0
    %1059 = vmatpush1.msra.mxu0 0.0
    %1060 = vmatprep.subr.mxu0 0.0
    %1061 = vmatpush1.msra.mxu0 0.0
    %1062 = vmatprep.subr.mxu0 0.0
    %1063 = vmatpush1.msra.mxu0 0.0
    %1064 = vmatprep.subr.mxu0 0.0
    %1065 = vmatpush1.msra.mxu0 0.0
    %1066 = vmatprep.subr.mxu0 0.0
    %1067 = vmatpush1.msra.mxu0 0.0
    %1068 = vmatprep.subr.mxu0 0.0
    %1069 = vmatpush1.msra.mxu0 0.0
    %1070 = vmatprep.subr.mxu0 0.0
    %1071 = vmatpush1.msra.mxu0 0.0
    %1072 = vmatprep.subr.mxu0 0.0
    %1073 = vmatpush1.msra.mxu0 0.0
    %1074 = vmatprep.subr.mxu0 0.0
    %1075 = vmatpush1.msra.mxu0 0.0
    %1076 = vmatprep.subr.mxu0 0.0
    %1077 = vmatpush1.msra.mxu0 0.0
    %1078 = vmatprep.subr.mxu0 0.0
    %1079 = vmatpush1.msra.mxu0 0.0
    %1080 = vmatprep.subr.mxu0 0.0
    %1081 = vmatpush1.msra.mxu0 0.0
    %1082 = vmatprep.subr.mxu0 0.0
    %1083 = vmatpush1.msra.mxu0 0.0
    %1084 = vmatprep.subr.mxu0 0.0
    %1085 = vmatpush1.msra.mxu0 0.0
    %1086 = vmatprep.subr.mxu0 0.0
    %1087 = vmatpush1.msra.mxu0 0.0
    %1088 = vmatprep.subr.mxu0 0.0
    %1089 = vmatpush1.msra.mxu0 0.0
    %1090 = vmatprep.subr.mxu0 0.0
    %1091 = vmatpush1.msra.mxu0 0.0
    %1092 = vmatprep.subr.mxu0 0.0
    %1093 = vmatpush1.msra.mxu0 0.0
    %1094 = vmatprep.subr.mxu0 0.0
    %1095 = vmatpush1.msra.mxu0 0.0
    %1096 = vmatprep.subr.mxu0 0.0
    %1097 = vmatpush1.msra.mxu0 0.0
    %1098 = vmatprep.mubr.f32.mxu0 0.0
    %1099 = vmatmul.mubr.f32.gmra.mrb[0].mxu0 %v1032
    %v1100 = vpop.f32.mrb[0].mxu0
    %v1101 = vadd.f32 %v1030, %v1100
    %v1102 = vpop.f32.mrb[0].mxu0
    %1103 = vdwg.mxu0
    %v1104 = vxor.u32 %v1101, 2147483648
    %v1105 = vmul.f32 %v1104, 1.442695
    %v1106 = vpow.pop %v1105
    %v1107 = vadd.f32 %v1106, 1.0
    %v1108 = vrcp.pop %v1107
    %v1109 = vmul.f32 1.0, %v1108
    %v1110 = vsel %vm609, %v402, 0.0
    %1111 = vadd.xlane.f32.xlu0 %v1110
    %v1112 = vpop.xlane.xlu0 %1111
    %v1113 = vrot.slane %v1112, 4
    %v1114 = vadd.f32 %v1112, %v1113
    %v1115 = vrot.slane %v1114, 2
    %v1116 = vadd.f32 %v1114, %v1115
    %v1117 = vrot.slane %v1116, 1
    %v1118 = vadd.f32 %v1116, %v1117
    %s1119 = vtos %v1118
    %v1120 = vstv %s1119
    %v1121 = vmul.f32 %v1120, %v225
    %1123 = vrot.lane.b32.xlu0 %v402, 120
    %v1124 = vpop.permute.xlu0 %1123
    %v1126 = vsel %vm609, %v1124, 0.0
    %1127 = vadd.xlane.f32.xlu0 %v1126
    %v1128 = vpop.xlane.xlu0 %1127
    %v1129 = vrot.slane %v1128, 4
    %v1130 = vadd.f32 %v1128, %v1129
    %v1131 = vrot.slane %v1130, 2
    %v1132 = vadd.f32 %v1130, %v1131
    %v1133 = vrot.slane %v1132, 1
    %v1134 = vadd.f32 %v1132, %v1133
    %s1135 = vtos %v1134
    %v1136 = vstv %s1135
    %v1137 = vmul.f32 %v1136, %v225
    %v1138 = vmul.f32 %v402, %v402
    %1140 = vrot.lane.b32.xlu0 %v1138, 112
    %v1141 = vpop.permute.xlu0 %1140
    %v1143 = vsel %vm46, %v1141, 0.0
    %1144 = vadd.xlane.f32.xlu0 %v1143
    %v1145 = vpop.xlane.xlu0 %1144
    %v1146 = vrot.slane %v1145, 4
    %v1147 = vadd.f32 %v1145, %v1146
    %v1148 = vrot.slane %v1147, 2
    %v1149 = vadd.f32 %v1147, %v1148
    %v1150 = vrot.slane %v1149, 1
    %v1151 = vadd.f32 %v1149, %v1150
    %s1152 = vtos %v1151
    %v1153 = vsel %vm46, %v1109, 0.0
    %1154 = vadd.xlane.f32.xlu0 %v1153
    %v1155 = vpop.xlane.xlu0 %1154
    %v1156 = vrot.slane %v1155, 4
    %v1157 = vadd.f32 %v1155, %v1156
    %v1158 = vrot.slane %v1157, 2
    %v1159 = vadd.f32 %v1157, %v1158
    %v1160 = vrot.slane %v1159, 1
    %v1161 = vadd.f32 %v1159, %v1160
    %s1162 = vtos %v1161
    %v1163 = vstv %s1162
    %v1164 = vrcp.pop 128.0
    %v1165 = vmul.f32 %v1163, %v1164
    %v1166 = vsub.f32 %v1109, 1.0
    %v1167 = vand.u32 2147483647, %v1166
    %v1168 = vsel %vm46, %v1167, 0.0
    %1169 = vadd.xlane.f32.xlu0 %v1168
    %v1170 = vpop.xlane.xlu0 %1169
    %v1171 = vrot.slane %v1170, 4
    %v1172 = vadd.f32 %v1170, %v1171
    %v1173 = vrot.slane %v1172, 2
    %v1174 = vadd.f32 %v1172, %v1173
    %v1175 = vrot.slane %v1174, 1
    %v1176 = vadd.f32 %v1174, %v1175
    %s1177 = vtos %v1176
    %v1178 = vstv %s1177
    %v1179 = vmul.f32 %v1178, %v1164
    %vm1180 = vcmp.eq.s32.totalorder %v121, 0
    %v1181 = vsel %vm1180, %v1121, 0.0
    %vm1182 = vcmp.eq.s32.totalorder %v121, 1
    %v1183 = vsel %vm1182, %v1137, 0.0
    %v1184 = vadd.f32 %v1181, %v1183
    %vm1185 = vcmp.eq.s32.totalorder %v121, 2
    %v1186 = vstv %s1152
    %v1187 = vsel %vm1185, %v1186, 0.0
    %v1188 = vadd.f32 %v1184, %v1187
    %vm1189 = vcmp.eq.s32.totalorder %v121, 3
    %v1190 = vsel %vm1189, %v1165, 0.0
    %v1191 = vadd.f32 %v1188, %v1190
    %vm1192 = vcmp.eq.s32.totalorder %v121, 4
    %v1193 = vsel %vm1192, %v1179, 0.0
    %v1194 = vadd.f32 %v1191, %v1193
    %1196 = vrot.lane.b32.xlu0 %v1109, 32
    %v1197 = vpop.permute.xlu0 %1196
    %1200 = vrot.lane.b32.xlu0 %v1194, 48
    %v1201 = vpop.permute.xlu0 %1200
    %v1203 = vsel %vm930, %v402, %v1197
    %v1204 = vsel %vm943, %v1203, %v1201
    %v1205 = vsel %vm221, %v1204, 0.0
    %1206 = vst [vmem:[#allocation7] sm:$0xff] %v1205
    // Predicated region
    $region18: #{_unity_forward_device.1} parent=1 // pred_check
      _
    $region19: #{_unity_forward_device.1} parent=1 // pred_check_branch
      %1208 = sbr.rel (0) target = $region21
    $region20: #{_unity_forward_device.1} parent=1 // pred_region
      %s1210 = ssub.s32 128, 128
      %1211 = vsyncadd [#allocation4], %s1210
      %s1213 = sshll.u32 [#allocation7], 4
      %s1214 = int_to_ptr.vmem [resolvable:$true] %s1213
      %1216 = dma.vmem_to_hbm [thread:$0]  %s1214, 128, %s2, [#allocation4]
    $region21: #{_unity_forward_device.1} parent=1 // pred_fallthru
      _
    // Predicated region
    $region22: #{_unity_forward_device.1} parent=1 // pred_check
      _
    $region23: #{_unity_forward_device.1} parent=1 // pred_check_branch
      %1218 = sbr.rel (0) target = $region25
    $region24: #{_unity_forward_device.1} parent=1 // pred_region
      %1219 = dma.done [#allocation4], 128
    $region25: #{_unity_forward_device.1} parent=1 // pred_fallthru
      _
    %1220 = vsyncpa [#allocation3], 1
    %1221 = vsyncpa [#allocation6], 1
    %1222 = vsyncpa [#allocation4], 1

</llo_original>
